<compile_context>
chip_gen: v7x
topology: tpu7x:2x2x1
jax: 0.10.0
libtpu: 0.0.40
codegen_flags: <defaults>
</compile_context>

<pallas_src>
import itertools

import jax
import jax.numpy as jnp
from jax.experimental import pallas as pl
from jax.experimental.pallas import tpu as pltpu

PATCH_GRID = 2                       # patch_size = H // 2  ->  2x2 = 4 patches
NUM_PATCHES = PATCH_GRID * PATCH_GRID
NUM_JIGSAW = 24                      # |itertools.permutations([0,1,2,3])|
FEAT_DIM = 512                       # self.feature.final_feat_dim
LANE = 128
SUBLANE = 8


def _round_up(x, m):
    return ((x + m - 1) // m) * m


# ----------------------------------------------------------------------------
# Fused kernels: feature matmul + bias + ReLU + both linear heads (one
# lane-padded head matmul).  bf16 MXU inputs, f32 accumulation/epilogue.
# ----------------------------------------------------------------------------
def _fused_kernel_single(x_ref, wf_ref, bf_ref, wcj_ref, bcj_ref, out_ref):
    """grid=(nb,): one batch tile, full K in a single MXU pass (no scratch)."""
    feat = jnp.dot(x_ref[...], wf_ref[...], preferred_element_type=jnp.float32)
    feat = jnp.maximum(feat + bf_ref[...], 0.0)
    out_ref[...] = (jnp.dot(feat.astype(wcj_ref.dtype), wcj_ref[...],
                            preferred_element_type=jnp.float32) + bcj_ref[...])


def _fused_kernel_ktiled(x_ref, wf_ref, bf_ref, wcj_ref, bcj_ref,
                         out_ref, acc_ref):
    """grid=(nb, nk): K-tiled contraction; reduction axis last / 'arbitrary'."""
    k = pl.program_id(1)

    @pl.when(k == 0)
    def _():
        acc_ref[...] = jnp.zeros_like(acc_ref)

    acc_ref[...] += jnp.dot(x_ref[...], wf_ref[...],
                            preferred_element_type=jnp.float32)

    @pl.when(k == pl.num_programs(1) - 1)
    def _():
        feat = jnp.maximum(acc_ref[...] + bf_ref[...], 0.0)
        out_ref[...] = (jnp.dot(feat.astype(wcj_ref.dtype), wcj_ref[...],
                                preferred_element_type=jnp.float32)
                        + bcj_ref[...])


def _choose_tiles(b_pad, k, f, npad, vmem_budget=24 * 1024 * 1024):
    """Pick (tile_b, tk) so the double-buffered working set fits the budget
    (budget chosen so tiles are safe even on v7x's 64 MiB VMEM)."""
    tile_b = min(256, b_pad)

    def working_set(tb, tk_):
        x_b = tb * tk_ * 2 * 2                      # bf16 x tile, double-buffered
        wf_b = tk_ * f * 2 * 2                      # bf16 wf K-block, double-buffered
        head = (f * npad * 2 + npad * 4 + f * 4) * 2  # wcj/bcj/bf (grid-invariant)
        acc_b = tb * f * 4
        out_b = tb * npad * 4 * 2
        return x_b + wf_b + head + acc_b + out_b

    tk = min(_round_up(k, 256), 4096)               # MXU-aligned K tile
    while working_set(tile_b, tk) > vmem_budget and tk > 256:
        tk -= 256
    return tile_b, tk, working_set(tile_b, tk)


def fused_forward_scores(x_flat, wf, bf, wcj, bcj):
    """x_flat: (B, K) bf16 (patch-major, already jigsaw-shuffled);
    wf: (K, F) bf16 (patch-major rows); bf: (1, F) f32;
    wcj: (F, NPAD) bf16; bcj: (1, NPAD) f32  ->  (B, NPAD) f32 scores."""
    b, k = x_flat.shape
    f = wf.shape[1]
    npad = wcj.shape[1]

    b_pad = _round_up(b, SUBLANE)
    tile_b, tk, ws = _choose_tiles(b_pad, k, f, npad)
    b_pad = _round_up(b_pad, tile_b)
    k_pad = _round_up(k, tk)
    nb, nk = b_pad // tile_b, k_pad // tk

    # Zero padding: extra K columns/rows contribute 0 to the dot, extra batch
    # rows are sliced away below.
    x_flat = jnp.pad(x_flat, ((0, b_pad - b), (0, k_pad - k)))
    wf = jnp.pad(wf, ((0, k_pad - k), (0, 0)))

    vmem_limit = min(64 * 1024 * 1024, max(32 * 1024 * 1024, 2 * ws))

    if nk == 1:
        # Single long-K pass per batch tile: no accumulator scratch, no
        # init/finalize branches (review item #4).
        grid_spec = pltpu.PrefetchScalarGridSpec(
            num_scalar_prefetch=0,
            grid=(nb,),
            in_specs=[
                pl.BlockSpec((tile_b, k_pad), lambda i: (i, 0)),
                pl.BlockSpec((k_pad, f), lambda i: (0, 0)),
                pl.BlockSpec((1, f), lambda i: (0, 0)),
                pl.BlockSpec((f, npad), lambda i: (0, 0)),
                pl.BlockSpec((1, npad), lambda i: (0, 0)),
            ],
            out_specs=pl.BlockSpec((tile_b, npad), lambda i: (i, 0)),
        )
        kernel = _fused_kernel_single
        dim_sem = ("parallel",)
    else:
        grid_spec = pltpu.PrefetchScalarGridSpec(
            num_scalar_prefetch=0,
            grid=(nb, nk),                           # reduction (K) axis last
            in_specs=[
                pl.BlockSpec((tile_b, tk), lambda i, j: (i, j)),
                pl.BlockSpec((tk, f), lambda i, j: (j, 0)),
                pl.BlockSpec((1, f), lambda i, j: (0, 0)),
                pl.BlockSpec((f, npad), lambda i, j: (0, 0)),
                pl.BlockSpec((1, npad), lambda i, j: (0, 0)),
            ],
            out_specs=pl.BlockSpec((tile_b, npad), lambda i, j: (i, 0)),
            scratch_shapes=[pltpu.VMEM((tile_b, f), jnp.float32)],
        )
        kernel = _fused_kernel_ktiled
        dim_sem = ("parallel", "arbitrary")

    scores = pl.pallas_call(
        kernel,
        grid_spec=grid_spec,
        out_shape=jax.ShapeDtypeStruct((b_pad, npad), jnp.float32),
        compiler_params=pltpu.CompilerParams(
            dimension_semantics=dim_sem,
            vmem_limit_bytes=vmem_limit),
    )(x_flat, wf, bf, wcj, bcj)
    return scores[:b]


# ----------------------------------------------------------------------------
# Glue (plain JAX): permutation labels, layout plumbing, head fusion/padding.
# ----------------------------------------------------------------------------
def perm_to_lex_index(perm):
    """Lexicographic index into itertools.permutations([0,1,2,3]) (Lehmer code;
    factorials hard-coded for the module's fixed 2x2 = 4 patches)."""
    factorials = (6, 2, 1, 1)
    idx = jnp.zeros((perm.shape[0],), jnp.int32)
    for i in range(NUM_PATCHES):
        smaller_after = jnp.sum(
            (perm[:, i + 1:] < perm[:, i:i + 1]).astype(jnp.int32), axis=1)
        idx = idx + smaller_after * factorials[i]
    return idx


def baseline_train_forward(params, x, key):
    """x: (B, C, H, W) NCHW, like the PyTorch module.
    Returns (classification_scores, jigsaw_scores, permutation_labels, perm)."""
    B, C, H, W = x.shape
    ps = H // PATCH_GRID
    D = C * ps * ps
    K = NUM_PATCHES * D          # == C * H * W

    # Per-image random patch permutation (mirrors torch.randperm per image).
    keys = jax.random.split(key, B)
    perm = jax.vmap(lambda k_: jax.random.permutation(k_, NUM_PATCHES))(keys)
    perm = perm.astype(jnp.int32)
    permutation_labels = perm_to_lex_index(perm)

    # NCHW -> patch-major patches (B, P, D); apply the jigsaw shuffle here as
    # a plain gather (layout plumbing), then flatten to one long K dimension.
    patches = x.reshape(B, C, PATCH_GRID, ps, PATCH_GRID, ps)
    patches = patches.transpose(0, 2, 4, 1, 3, 5).reshape(B, NUM_PATCHES, D)
    shuffled = jnp.take_along_axis(patches, perm[:, :, None], axis=1)
    x_flat = shuffled.reshape(B, K).astype(jnp.bfloat16)

    # wf rows reordered ONCE from NCHW-flatten order to patch-major order so
    #   x_flat @ wf_patch == flatten(F.fold(shuffled_patches)) @ wf.
    wf = params["wf"]
    feat_dim = wf.shape[1]
    wf_patch = wf.reshape(C, PATCH_GRID, ps, PATCH_GRID, ps, feat_dim)
    wf_patch = wf_patch.transpose(1, 3, 0, 2, 4, 5).reshape(K, feat_dim)
    wf_patch = wf_patch.astype(jnp.bfloat16)

    # Fuse both heads into one lane-padded (feat_dim, NPAD=128) matmul.
    num_class = params["wc"].shape[1]
    n_heads = num_class + NUM_JIGSAW
    n_pad = _round_up(n_heads, LANE)
    wcj = jnp.concatenate([params["wc"], params["wj"]], axis=1)
    wcj = jnp.pad(wcj, ((0, 0), (0, n_pad - n_heads))).astype(jnp.bfloat16)
    bcj = jnp.concatenate([params["bc"], params["bj"]], axis=1)
    bcj = jnp.pad(bcj, ((0, 0), (0, n_pad - n_heads))).astype(jnp.float32)
    bf = params["bf"].astype(jnp.float32)

    scores = fused_forward_scores(x_flat, wf_patch, bf, wcj, bcj)
    cls_scores = scores[:, :num_class]
    jig_scores = scores[:, num_class:n_heads]
    return cls_scores, jig_scores, permutation_labels, perm


# ----------------------------------------------------------------------------
# Plain-JAX reference (same bf16/f32 mixed precision) for a correctness check.
# ----------------------------------------------------------------------------
def _reference_scores(params, x, perm):
    B, C, H, W = x.shape
    ps = H // PATCH_GRID
    D = C * ps * ps
    patches = x.reshape(B, C, PATCH_GRID, ps, PATCH_GRID, ps)
    patches = patches.transpose(0, 2, 4, 1, 3, 5).reshape(B, NUM_PATCHES, D)
    shuffled = jnp.take_along_axis(patches, perm[:, :, None], axis=1)
    img = shuffled.reshape(B, PATCH_GRID, PATCH_GRID, C, ps, ps)
    img = img.transpose(0, 3, 1, 4, 2, 5).reshape(B, C * H * W)
    feat = jnp.dot(img.astype(jnp.bfloat16), params["wf"].astype(jnp.bfloat16),
                   preferred_element_type=jnp.float32) + params["bf"]
    feat = jnp.maximum(feat, 0.0).astype(jnp.bfloat16)
    cls = jnp.dot(feat, params["wc"].astype(jnp.bfloat16),
                  preferred_element_type=jnp.float32) + params["bc"]
    jig = jnp.dot(feat, params["wj"].astype(jnp.bfloat16),
                  preferred_element_type=jnp.float32) + params["bj"]
    return cls, jig


if __name__ == "__main__":
    key = jax.random.PRNGKey(0)
    k_x, k_perm, k_wf, k_wc, k_wj, k_bj = jax.random.split(key, 6)

    B, C, H, W = 2, 4, 16, 16          # small NCHW input (patch_size = 8)
    num_class = 5

    x = jax.random.normal(k_x, (B, C, H, W), jnp.float32)

    params = dict(
        # TODO(synk): backbone_rot.ResNet(SimpleBlock,[1,1,1,1],[64,128,256,512])
        # is an external dependency; approximated by one dense+ReLU projection
        # to FEAT_DIM=512 (the two Linear heads on top match the module).
        wf=0.02 * jax.random.normal(k_wf, (C * H * W, FEAT_DIM), jnp.float32),
        bf=jnp.zeros((1, FEAT_DIM), jnp.float32),
        # self.classifier = nn.Linear(final_feat_dim, num_class); bias.fill_(0)
        wc=0.02 * jax.random.normal(k_wc, (FEAT_DIM, num_class), jnp.float32),
        bc=jnp.zeros((1, num_class), jnp.float32),
        # self.jigsaw_classifier = nn.Linear(final_feat_dim, 24)
        wj=0.02 * jax.random.normal(k_wj, (FEAT_DIM, NUM_JIGSAW), jnp.float32),
        bj=0.01 * jax.random.normal(k_bj, (1, NUM_JIGSAW), jnp.float32),
    )

    fwd = jax.jit(baseline_train_forward)
    cls_scores, jig_scores, perm_labels, perm = fwd(params, x, k_perm)
    jax.block_until_ready((cls_scores, jig_scores, perm_labels))

    assert cls_scores.shape == (B, num_class)
    assert jig_scores.shape == (B, NUM_JIGSAW)
    assert perm_labels.shape == (B,)
    assert bool(jnp.all((perm_labels >= 0) & (perm_labels < NUM_JIGSAW)))

    # Check permutation labels against itertools.permutations lex order.
    lex = list(itertools.permutations(range(NUM_PATCHES)))
    for b in range(B):
        expected = lex.index(tuple(int(v) for v in perm[b]))
        assert int(perm_labels[b]) == expected

    # Check the fused batch-tiled kernel against the plain-JAX reference.
    ref_cls, ref_jig = _reference_scores(params, x, perm)
    assert bool(jnp.allclose(cls_scores, ref_cls, atol=1e-2, rtol=1e-2))
    assert bool(jnp.allclose(jig_scores, ref_jig, atol=1e-2, rtol=1e-2))

    print("KERNEL_OK")
</pallas_src>

<mosaic_0001>
module attributes {stable_mosaic.version = 11 : i64} {
  func.func @_fused_kernel_single(%arg0: i32, %arg1: memref<8x1024xbf16, #tpu.memory_space<vmem>>, %arg2: memref<1024x512xbf16, #tpu.memory_space<vmem>>, %arg3: memref<1x512xf32, #tpu.memory_space<vmem>>, %arg4: memref<512x128xbf16, #tpu.memory_space<vmem>>, %arg5: memref<1x128xf32, #tpu.memory_space<vmem>>, %arg6: memref<8x128xf32, #tpu.memory_space<vmem>>) attributes {dimension_semantics = [#tpu.dimension_semantics<parallel>], iteration_bounds = array<i64: 1>, scalar_prefetch = 0 : i64, scratch_operands = 0 : i64, tpu.core_type = #tpu.core_type<tc>, window_params = [{transform_indices = @transform_0, window_bounds = array<i64: 8, 1024>}, {pipeline_mode = #tpu.pipeline_mode<synchronous>, transform_indices = @transform_1, window_bounds = array<i64: 1024, 512>}, {pipeline_mode = #tpu.pipeline_mode<synchronous>, transform_indices = @transform_2, window_bounds = array<i64: 1, 512>}, {pipeline_mode = #tpu.pipeline_mode<synchronous>, transform_indices = @transform_3, window_bounds = array<i64: 512, 128>}, {pipeline_mode = #tpu.pipeline_mode<synchronous>, transform_indices = @transform_4, window_bounds = array<i64: 1, 128>}, {transform_indices = @transform_5, window_bounds = array<i64: 8, 128>}]} {
    %c0 = arith.constant 0 : index
    %c0_0 = arith.constant 0 : index
    %0 = vector.load %arg1[%c0, %c0_0] : memref<8x1024xbf16, #tpu.memory_space<vmem>>, vector<8x1024xbf16>
    %c0_1 = arith.constant 0 : index
    %c0_2 = arith.constant 0 : index
    %1 = vector.load %arg2[%c0_1, %c0_2] : memref<1024x512xbf16, #tpu.memory_space<vmem>>, vector<1024x512xbf16>
    %cst = arith.constant dense<0.000000e+00> : vector<8x512xf32>
    %2 = tpu.matmul %0, %1, %cst {dimension_numbers = #tpu.dot_dimension_numbers<[1], [0], [0], [1], [0, 0, 1, 1], [], []>} : vector<8x1024xbf16>, vector<1024x512xbf16>, vector<8x512xf32> -> vector<8x512xf32>
    %c0_3 = arith.constant 0 : index
    %c0_4 = arith.constant 0 : index
    %3 = vector.load %arg3[%c0_3, %c0_4] : memref<1x512xf32, #tpu.memory_space<vmem>>, vector<1x512xf32>
    %4 = vector.broadcast %3 : vector<1x512xf32> to vector<8x512xf32>
    %5 = arith.addf %2, %4 : vector<8x512xf32>
    %cst_5 = arith.constant 0.000000e+00 : f32
    %6 = vector.broadcast %cst_5 : f32 to vector<8x512xf32>
    %7 = arith.maximumf %5, %6 : vector<8x512xf32>
    %8 = arith.truncf %7 : vector<8x512xf32> to vector<8x512xbf16>
    %c0_6 = arith.constant 0 : index
    %c0_7 = arith.constant 0 : index
    %9 = vector.load %arg4[%c0_6, %c0_7] : memref<512x128xbf16, #tpu.memory_space<vmem>>, vector<512x128xbf16>
    %cst_8 = arith.constant dense<0.000000e+00> : vector<8x128xf32>
    %10 = tpu.matmul %8, %9, %cst_8 {dimension_numbers = #tpu.dot_dimension_numbers<[1], [0], [0], [1], [0, 0, 1, 1], [], []>} : vector<8x512xbf16>, vector<512x128xbf16>, vector<8x128xf32> -> vector<8x128xf32>
    %c0_9 = arith.constant 0 : index
    %c0_10 = arith.constant 0 : index
    %11 = vector.load %arg5[%c0_9, %c0_10] : memref<1x128xf32, #tpu.memory_space<vmem>>, vector<1x128xf32>
    %12 = vector.broadcast %11 : vector<1x128xf32> to vector<8x128xf32>
    %13 = arith.addf %10, %12 : vector<8x128xf32>
    %c0_11 = arith.constant 0 : index
    %c0_12 = arith.constant 0 : index
    %14 = vector.load %arg6[%c0_11, %c0_12] : memref<8x128xf32, #tpu.memory_space<vmem>>, vector<8x128xf32>
    tpu.vector_store %arg6[%c0_11, %c0_12], %13 {strides = array<i32>} : memref<8x128xf32, #tpu.memory_space<vmem>>, vector<8x128xf32>,
    return
  }
  func.func @transform_0(%arg0: i32) -> (i32, i32) {
    %c0_i32 = arith.constant 0 : i32
    %c0_i32_0 = arith.constant 0 : i32
    return %arg0, %c0_i32 : i32, i32
  }
  func.func @transform_1(%arg0: i32) -> (i32, i32) {
    %c0_i32 = arith.constant 0 : i32
    %c0_i32_0 = arith.constant 0 : i32
    %c0_i32_1 = arith.constant 0 : i32
    return %c0_i32, %c0_i32_0 : i32, i32
  }
  func.func @transform_2(%arg0: i32) -> (i32, i32) {
    %c0_i32 = arith.constant 0 : i32
    %c0_i32_0 = arith.constant 0 : i32
    %c0_i32_1 = arith.constant 0 : i32
    return %c0_i32, %c0_i32_0 : i32, i32
  }
  func.func @transform_3(%arg0: i32) -> (i32, i32) {
    %c0_i32 = arith.constant 0 : i32
    %c0_i32_0 = arith.constant 0 : i32
    %c0_i32_1 = arith.constant 0 : i32
    return %c0_i32, %c0_i32_0 : i32, i32
  }
  func.func @transform_4(%arg0: i32) -> (i32, i32) {
    %c0_i32 = arith.constant 0 : i32
    %c0_i32_0 = arith.constant 0 : i32
    %c0_i32_1 = arith.constant 0 : i32
    return %c0_i32, %c0_i32_0 : i32, i32
  }
  func.func @transform_5(%arg0: i32) -> (i32, i32) {
    %c0_i32 = arith.constant 0 : i32
    %c0_i32_0 = arith.constant 0 : i32
    return %arg0, %c0_i32 : i32, i32
  }
}

</mosaic_0001>

<llo_original>
// kernel: baseline_train_forward.1
$region0: #{baseline_train_forward.1}
  #allocation0 [shape = 'u32[]', space=smem, size = 0x4, offset = 0x4, fixed_abs, tag = 'smem constant byte address 0x4 - core index']
  #allocation1 [shape = 'u32[144,128]{1,0:T(1,128)}', space=vmem, size = 0x12000, scoped, tag = 'internal scratch']
  %s0 = inlined_call_operand.vmem [shape: bf16[8,1024], index: 0, kind: input, shape index: {}]
  %s1 = inlined_call_operand.vmem [shape: bf16[1024,512], index: 1, kind: input, shape index: {}]
  %s2 = inlined_call_operand.vmem [shape: f32[1,512], index: 2, kind: input, shape index: {}]
  %s3 = inlined_call_operand.vmem [shape: bf16[512,128], index: 3, kind: input, shape index: {}]
  %s4 = inlined_call_operand.vmem [shape: f32[1,128], index: 4, kind: input, shape index: {}]
  %s5 = inlined_call_operand.vmem [shape: f32[8,128], index: 5, kind: output, shape index: {}]
  %s6 = sld [smem:[#allocation0]]
  $region30: #{baseline_train_forward.1} parent=0
    _
  %s8 = ssub.s32 1, %s6
  %s9 = scalar_select 0, %s8, %s6
  // Predicated region
  $region2: #{baseline_train_forward.1} parent=0 // pred_check
    _
  $region3: #{baseline_train_forward.1} parent=0 // pred_check_branch
    %11 = sbr.rel (0) target = $region5
  $region4: #{baseline_train_forward.1} parent=0 // pred_region
    _
  $region5: #{baseline_train_forward.1} parent=0 // pred_fallthru
    _
  // Predicated region
  $region6: #{baseline_train_forward.1} parent=0 // pred_check
    _
  $region7: #{baseline_train_forward.1} parent=0 // pred_check_branch
    %13 = sbr.rel (0) target = $region9
  $region8: #{baseline_train_forward.1} parent=0 // pred_region
    _
  $region9: #{baseline_train_forward.1} parent=0 // pred_fallthru
    _
  // Predicated region
  $region10: #{baseline_train_forward.1} parent=0 // pred_check
    _
  $region11: #{baseline_train_forward.1} parent=0 // pred_check_branch
    %15 = sbr.rel (0) target = $region13
  $region12: #{baseline_train_forward.1} parent=0 // pred_region
    _
  $region13: #{baseline_train_forward.1} parent=0 // pred_fallthru
    _
  // Predicated region
  $region14: #{baseline_train_forward.1} parent=0 // pred_check
    _
  $region15: #{baseline_train_forward.1} parent=0 // pred_check_branch
    %17 = sbr.rel (0) target = $region17
  $region16: #{baseline_train_forward.1} parent=0 // pred_region
    _
  $region17: #{baseline_train_forward.1} parent=0 // pred_fallthru
    _
  // Predicated region
  $region18: #{baseline_train_forward.1} parent=0 // pred_check
    _
  $region19: #{baseline_train_forward.1} parent=0 // pred_check_branch
    %19 = sbr.rel (0) target = $region21
  $region20: #{baseline_train_forward.1} parent=0 // pred_region
    _
  $region21: #{baseline_train_forward.1} parent=0 // pred_fallthru
    _
  %v21 = vld [vmem:[%s0] sm:$0xff]
  %v22 = vld [vmem:[%s0 + $0x8] sm:$0xff]
  %v23 = vld [vmem:[%s0 + $0x10] sm:$0xff]
  %v24 = vld [vmem:[%s0 + $0x18] sm:$0xff]
  %v25 = vld [vmem:[%s1] sm:$0xff]
  %v26 = vld [vmem:[%s1 + $0x8] sm:$0xff]
  %v27 = vld [vmem:[%s1 + $0x10] sm:$0xff]
  %v28 = vld [vmem:[%s1 + $0x18] sm:$0xff]
  %v29 = vld [vmem:[%s1 + $0x20] sm:$0xff]
  %v30 = vld [vmem:[%s1 + $0x28] sm:$0xff]
  %v31 = vld [vmem:[%s1 + $0x30] sm:$0xff]
  %v32 = vld [vmem:[%s1 + $0x38] sm:$0xff]
  %v33 = vld [vmem:[%s1 + $0x40] sm:$0xff]
  %v34 = vld [vmem:[%s1 + $0x48] sm:$0xff]
  %v35 = vld [vmem:[%s1 + $0x50] sm:$0xff]
  %v36 = vld [vmem:[%s1 + $0x58] sm:$0xff]
  %v37 = vld [vmem:[%s1 + $0x60] sm:$0xff]
  %v38 = vld [vmem:[%s1 + $0x68] sm:$0xff]
  %v39 = vld [vmem:[%s1 + $0x70] sm:$0xff]
  %v40 = vld [vmem:[%s1 + $0x78] sm:$0xff]
  %v41 = vld [vmem:[%s1 + $0x80] sm:$0xff]
  %v42 = vld [vmem:[%s1 + $0x88] sm:$0xff]
  %v43 = vld [vmem:[%s1 + $0x90] sm:$0xff]
  %v44 = vld [vmem:[%s1 + $0x98] sm:$0xff]
  %v45 = vld [vmem:[%s1 + $0xa0] sm:$0xff]
  %v46 = vld [vmem:[%s1 + $0xa8] sm:$0xff]
  %v47 = vld [vmem:[%s1 + $0xb0] sm:$0xff]
  %v48 = vld [vmem:[%s1 + $0xb8] sm:$0xff]
  %v49 = vld [vmem:[%s1 + $0xc0] sm:$0xff]
  %v50 = vld [vmem:[%s1 + $0xc8] sm:$0xff]
  %v51 = vld [vmem:[%s1 + $0xd0] sm:$0xff]
  %v52 = vld [vmem:[%s1 + $0xd8] sm:$0xff]
  %v53 = vld [vmem:[%s1 + $0xe0] sm:$0xff]
  %v54 = vld [vmem:[%s1 + $0xe8] sm:$0xff]
  %v55 = vld [vmem:[%s1 + $0xf0] sm:$0xff]
  %v56 = vld [vmem:[%s1 + $0xf8] sm:$0xff]
  %v57 = vld [vmem:[%s1 + $0x100] sm:$0xff]
  %v58 = vld [vmem:[%s1 + $0x108] sm:$0xff]
  %v59 = vld [vmem:[%s1 + $0x110] sm:$0xff]
  %v60 = vld [vmem:[%s1 + $0x118] sm:$0xff]
  %v61 = vld [vmem:[%s1 + $0x120] sm:$0xff]
  %v62 = vld [vmem:[%s1 + $0x128] sm:$0xff]
  %v63 = vld [vmem:[%s1 + $0x130] sm:$0xff]
  %v64 = vld [vmem:[%s1 + $0x138] sm:$0xff]
  %v65 = vld [vmem:[%s1 + $0x140] sm:$0xff]
  %v66 = vld [vmem:[%s1 + $0x148] sm:$0xff]
  %v67 = vld [vmem:[%s1 + $0x150] sm:$0xff]
  %v68 = vld [vmem:[%s1 + $0x158] sm:$0xff]
  %v69 = vld [vmem:[%s1 + $0x160] sm:$0xff]
  %v70 = vld [vmem:[%s1 + $0x168] sm:$0xff]
  %v71 = vld [vmem:[%s1 + $0x170] sm:$0xff]
  %v72 = vld [vmem:[%s1 + $0x178] sm:$0xff]
  %v73 = vld [vmem:[%s1 + $0x180] sm:$0xff]
  %v74 = vld [vmem:[%s1 + $0x188] sm:$0xff]
  %v75 = vld [vmem:[%s1 + $0x190] sm:$0xff]
  %v76 = vld [vmem:[%s1 + $0x198] sm:$0xff]
  %v77 = vld [vmem:[%s1 + $0x1a0] sm:$0xff]
  %v78 = vld [vmem:[%s1 + $0x1a8] sm:$0xff]
  %v79 = vld [vmem:[%s1 + $0x1b0] sm:$0xff]
  %v80 = vld [vmem:[%s1 + $0x1b8] sm:$0xff]
  %v81 = vld [vmem:[%s1 + $0x1c0] sm:$0xff]
  %v82 = vld [vmem:[%s1 + $0x1c8] sm:$0xff]
  %v83 = vld [vmem:[%s1 + $0x1d0] sm:$0xff]
  %v84 = vld [vmem:[%s1 + $0x1d8] sm:$0xff]
  %v85 = vld [vmem:[%s1 + $0x1e0] sm:$0xff]
  %v86 = vld [vmem:[%s1 + $0x1e8] sm:$0xff]
  %v87 = vld [vmem:[%s1 + $0x1f0] sm:$0xff]
  %v88 = vld [vmem:[%s1 + $0x1f8] sm:$0xff]
  %v89 = vld [vmem:[%s1 + $0x200] sm:$0xff]
  %v90 = vld [vmem:[%s1 + $0x208] sm:$0xff]
  %v91 = vld [vmem:[%s1 + $0x210] sm:$0xff]
  %v92 = vld [vmem:[%s1 + $0x218] sm:$0xff]
  %v93 = vld [vmem:[%s1 + $0x220] sm:$0xff]
  %v94 = vld [vmem:[%s1 + $0x228] sm:$0xff]
  %v95 = vld [vmem:[%s1 + $0x230] sm:$0xff]
  %v96 = vld [vmem:[%s1 + $0x238] sm:$0xff]
  %v97 = vld [vmem:[%s1 + $0x240] sm:$0xff]
  %v98 = vld [vmem:[%s1 + $0x248] sm:$0xff]
  %v99 = vld [vmem:[%s1 + $0x250] sm:$0xff]
  %v100 = vld [vmem:[%s1 + $0x258] sm:$0xff]
  %v101 = vld [vmem:[%s1 + $0x260] sm:$0xff]
  %v102 = vld [vmem:[%s1 + $0x268] sm:$0xff]
  %v103 = vld [vmem:[%s1 + $0x270] sm:$0xff]
  %v104 = vld [vmem:[%s1 + $0x278] sm:$0xff]
  %v105 = vld [vmem:[%s1 + $0x280] sm:$0xff]
  %v106 = vld [vmem:[%s1 + $0x288] sm:$0xff]
  %v107 = vld [vmem:[%s1 + $0x290] sm:$0xff]
  %v108 = vld [vmem:[%s1 + $0x298] sm:$0xff]
  %v109 = vld [vmem:[%s1 + $0x2a0] sm:$0xff]
  %v110 = vld [vmem:[%s1 + $0x2a8] sm:$0xff]
  %v111 = vld [vmem:[%s1 + $0x2b0] sm:$0xff]
  %v112 = vld [vmem:[%s1 + $0x2b8] sm:$0xff]
  %v113 = vld [vmem:[%s1 + $0x2c0] sm:$0xff]
  %v114 = vld [vmem:[%s1 + $0x2c8] sm:$0xff]
  %v115 = vld [vmem:[%s1 + $0x2d0] sm:$0xff]
  %v116 = vld [vmem:[%s1 + $0x2d8] sm:$0xff]
  %v117 = vld [vmem:[%s1 + $0x2e0] sm:$0xff]
  %v118 = vld [vmem:[%s1 + $0x2e8] sm:$0xff]
  %v119 = vld [vmem:[%s1 + $0x2f0] sm:$0xff]
  %v120 = vld [vmem:[%s1 + $0x2f8] sm:$0xff]
  %v121 = vld [vmem:[%s1 + $0x300] sm:$0xff]
  %v122 = vld [vmem:[%s1 + $0x308] sm:$0xff]
  %v123 = vld [vmem:[%s1 + $0x310] sm:$0xff]
  %v124 = vld [vmem:[%s1 + $0x318] sm:$0xff]
  %v125 = vld [vmem:[%s1 + $0x320] sm:$0xff]
  %v126 = vld [vmem:[%s1 + $0x328] sm:$0xff]
  %v127 = vld [vmem:[%s1 + $0x330] sm:$0xff]
  %v128 = vld [vmem:[%s1 + $0x338] sm:$0xff]
  %v129 = vld [vmem:[%s1 + $0x340] sm:$0xff]
  %v130 = vld [vmem:[%s1 + $0x348] sm:$0xff]
  %v131 = vld [vmem:[%s1 + $0x350] sm:$0xff]
  %v132 = vld [vmem:[%s1 + $0x358] sm:$0xff]
  %v133 = vld [vmem:[%s1 + $0x360] sm:$0xff]
  %v134 = vld [vmem:[%s1 + $0x368] sm:$0xff]
  %v135 = vld [vmem:[%s1 + $0x370] sm:$0xff]
  %v136 = vld [vmem:[%s1 + $0x378] sm:$0xff]
  %v137 = vld [vmem:[%s1 + $0x380] sm:$0xff]
  %v138 = vld [vmem:[%s1 + $0x388] sm:$0xff]
  %v139 = vld [vmem:[%s1 + $0x390] sm:$0xff]
  %v140 = vld [vmem:[%s1 + $0x398] sm:$0xff]
  %v141 = vld [vmem:[%s1 + $0x3a0] sm:$0xff]
  %v142 = vld [vmem:[%s1 + $0x3a8] sm:$0xff]
  %v143 = vld [vmem:[%s1 + $0x3b0] sm:$0xff]
  %v144 = vld [vmem:[%s1 + $0x3b8] sm:$0xff]
  %v145 = vld [vmem:[%s1 + $0x3c0] sm:$0xff]
  %v146 = vld [vmem:[%s1 + $0x3c8] sm:$0xff]
  %v147 = vld [vmem:[%s1 + $0x3d0] sm:$0xff]
  %v148 = vld [vmem:[%s1 + $0x3d8] sm:$0xff]
  %v149 = vld [vmem:[%s1 + $0x3e0] sm:$0xff]
  %v150 = vld [vmem:[%s1 + $0x3e8] sm:$0xff]
  %v151 = vld [vmem:[%s1 + $0x3f0] sm:$0xff]
  %v152 = vld [vmem:[%s1 + $0x3f8] sm:$0xff]
  %v153 = vld [vmem:[%s1 + $0x400] sm:$0xff]
  %v154 = vld [vmem:[%s1 + $0x408] sm:$0xff]
  %v155 = vld [vmem:[%s1 + $0x410] sm:$0xff]
  %v156 = vld [vmem:[%s1 + $0x418] sm:$0xff]
  %v157 = vld [vmem:[%s1 + $0x420] sm:$0xff]
  %v158 = vld [vmem:[%s1 + $0x428] sm:$0xff]
  %v159 = vld [vmem:[%s1 + $0x430] sm:$0xff]
  %v160 = vld [vmem:[%s1 + $0x438] sm:$0xff]
  %v161 = vld [vmem:[%s1 + $0x440] sm:$0xff]
  %v162 = vld [vmem:[%s1 + $0x448] sm:$0xff]
  %v163 = vld [vmem:[%s1 + $0x450] sm:$0xff]
  %v164 = vld [vmem:[%s1 + $0x458] sm:$0xff]
  %v165 = vld [vmem:[%s1 + $0x460] sm:$0xff]
  %v166 = vld [vmem:[%s1 + $0x468] sm:$0xff]
  %v167 = vld [vmem:[%s1 + $0x470] sm:$0xff]
  %v168 = vld [vmem:[%s1 + $0x478] sm:$0xff]
  %v169 = vld [vmem:[%s1 + $0x480] sm:$0xff]
  %v170 = vld [vmem:[%s1 + $0x488] sm:$0xff]
  %v171 = vld [vmem:[%s1 + $0x490] sm:$0xff]
  %v172 = vld [vmem:[%s1 + $0x498] sm:$0xff]
  %v173 = vld [vmem:[%s1 + $0x4a0] sm:$0xff]
  %v174 = vld [vmem:[%s1 + $0x4a8] sm:$0xff]
  %v175 = vld [vmem:[%s1 + $0x4b0] sm:$0xff]
  %v176 = vld [vmem:[%s1 + $0x4b8] sm:$0xff]
  %v177 = vld [vmem:[%s1 + $0x4c0] sm:$0xff]
  %v178 = vld [vmem:[%s1 + $0x4c8] sm:$0xff]
  %v179 = vld [vmem:[%s1 + $0x4d0] sm:$0xff]
  %v180 = vld [vmem:[%s1 + $0x4d8] sm:$0xff]
  %v181 = vld [vmem:[%s1 + $0x4e0] sm:$0xff]
  %v182 = vld [vmem:[%s1 + $0x4e8] sm:$0xff]
  %v183 = vld [vmem:[%s1 + $0x4f0] sm:$0xff]
  %v184 = vld [vmem:[%s1 + $0x4f8] sm:$0xff]
  %v185 = vld [vmem:[%s1 + $0x500] sm:$0xff]
  %v186 = vld [vmem:[%s1 + $0x508] sm:$0xff]
  %v187 = vld [vmem:[%s1 + $0x510] sm:$0xff]
  %v188 = vld [vmem:[%s1 + $0x518] sm:$0xff]
  %v189 = vld [vmem:[%s1 + $0x520] sm:$0xff]
  %v190 = vld [vmem:[%s1 + $0x528] sm:$0xff]
  %v191 = vld [vmem:[%s1 + $0x530] sm:$0xff]
  %v192 = vld [vmem:[%s1 + $0x538] sm:$0xff]
  %v193 = vld [vmem:[%s1 + $0x540] sm:$0xff]
  %v194 = vld [vmem:[%s1 + $0x548] sm:$0xff]
  %v195 = vld [vmem:[%s1 + $0x550] sm:$0xff]
  %v196 = vld [vmem:[%s1 + $0x558] sm:$0xff]
  %v197 = vld [vmem:[%s1 + $0x560] sm:$0xff]
  %v198 = vld [vmem:[%s1 + $0x568] sm:$0xff]
  %v199 = vld [vmem:[%s1 + $0x570] sm:$0xff]
  %v200 = vld [vmem:[%s1 + $0x578] sm:$0xff]
  %v201 = vld [vmem:[%s1 + $0x580] sm:$0xff]
  %v202 = vld [vmem:[%s1 + $0x588] sm:$0xff]
  %v203 = vld [vmem:[%s1 + $0x590] sm:$0xff]
  %v204 = vld [vmem:[%s1 + $0x598] sm:$0xff]
  %v205 = vld [vmem:[%s1 + $0x5a0] sm:$0xff]
  %v206 = vld [vmem:[%s1 + $0x5a8] sm:$0xff]
  %v207 = vld [vmem:[%s1 + $0x5b0] sm:$0xff]
  %v208 = vld [vmem:[%s1 + $0x5b8] sm:$0xff]
  %v209 = vld [vmem:[%s1 + $0x5c0] sm:$0xff]
  %v210 = vld [vmem:[%s1 + $0x5c8] sm:$0xff]
  %v211 = vld [vmem:[%s1 + $0x5d0] sm:$0xff]
  %v212 = vld [vmem:[%s1 + $0x5d8] sm:$0xff]
  %v213 = vld [vmem:[%s1 + $0x5e0] sm:$0xff]
  %v214 = vld [vmem:[%s1 + $0x5e8] sm:$0xff]
  %v215 = vld [vmem:[%s1 + $0x5f0] sm:$0xff]
  %v216 = vld [vmem:[%s1 + $0x5f8] sm:$0xff]
  %v217 = vld [vmem:[%s1 + $0x600] sm:$0xff]
  %v218 = vld [vmem:[%s1 + $0x608] sm:$0xff]
  %v219 = vld [vmem:[%s1 + $0x610] sm:$0xff]
  %v220 = vld [vmem:[%s1 + $0x618] sm:$0xff]
  %v221 = vld [vmem:[%s1 + $0x620] sm:$0xff]
  %v222 = vld [vmem:[%s1 + $0x628] sm:$0xff]
  %v223 = vld [vmem:[%s1 + $0x630] sm:$0xff]
  %v224 = vld [vmem:[%s1 + $0x638] sm:$0xff]
  %v225 = vld [vmem:[%s1 + $0x640] sm:$0xff]
  %v226 = vld [vmem:[%s1 + $0x648] sm:$0xff]
  %v227 = vld [vmem:[%s1 + $0x650] sm:$0xff]
  %v228 = vld [vmem:[%s1 + $0x658] sm:$0xff]
  %v229 = vld [vmem:[%s1 + $0x660] sm:$0xff]
  %v230 = vld [vmem:[%s1 + $0x668] sm:$0xff]
  %v231 = vld [vmem:[%s1 + $0x670] sm:$0xff]
  %v232 = vld [vmem:[%s1 + $0x678] sm:$0xff]
  %v233 = vld [vmem:[%s1 + $0x680] sm:$0xff]
  %v234 = vld [vmem:[%s1 + $0x688] sm:$0xff]
  %v235 = vld [vmem:[%s1 + $0x690] sm:$0xff]
  %v236 = vld [vmem:[%s1 + $0x698] sm:$0xff]
  %v237 = vld [vmem:[%s1 + $0x6a0] sm:$0xff]
  %v238 = vld [vmem:[%s1 + $0x6a8] sm:$0xff]
  %v239 = vld [vmem:[%s1 + $0x6b0] sm:$0xff]
  %v240 = vld [vmem:[%s1 + $0x6b8] sm:$0xff]
  %v241 = vld [vmem:[%s1 + $0x6c0] sm:$0xff]
  %v242 = vld [vmem:[%s1 + $0x6c8] sm:$0xff]
  %v243 = vld [vmem:[%s1 + $0x6d0] sm:$0xff]
  %v244 = vld [vmem:[%s1 + $0x6d8] sm:$0xff]
  %v245 = vld [vmem:[%s1 + $0x6e0] sm:$0xff]
  %v246 = vld [vmem:[%s1 + $0x6e8] sm:$0xff]
  %v247 = vld [vmem:[%s1 + $0x6f0] sm:$0xff]
  %v248 = vld [vmem:[%s1 + $0x6f8] sm:$0xff]
  %v249 = vld [vmem:[%s1 + $0x700] sm:$0xff]
  %v250 = vld [vmem:[%s1 + $0x708] sm:$0xff]
  %v251 = vld [vmem:[%s1 + $0x710] sm:$0xff]
  %v252 = vld [vmem:[%s1 + $0x718] sm:$0xff]
  %v253 = vld [vmem:[%s1 + $0x720] sm:$0xff]
  %v254 = vld [vmem:[%s1 + $0x728] sm:$0xff]
  %v255 = vld [vmem:[%s1 + $0x730] sm:$0xff]
  %v256 = vld [vmem:[%s1 + $0x738] sm:$0xff]
  %v257 = vld [vmem:[%s1 + $0x740] sm:$0xff]
  %v258 = vld [vmem:[%s1 + $0x748] sm:$0xff]
  %v259 = vld [vmem:[%s1 + $0x750] sm:$0xff]
  %v260 = vld [vmem:[%s1 + $0x758] sm:$0xff]
  %v261 = vld [vmem:[%s1 + $0x760] sm:$0xff]
  %v262 = vld [vmem:[%s1 + $0x768] sm:$0xff]
  %v263 = vld [vmem:[%s1 + $0x770] sm:$0xff]
  %v264 = vld [vmem:[%s1 + $0x778] sm:$0xff]
  %v265 = vld [vmem:[%s1 + $0x780] sm:$0xff]
  %v266 = vld [vmem:[%s1 + $0x788] sm:$0xff]
  %v267 = vld [vmem:[%s1 + $0x790] sm:$0xff]
  %v268 = vld [vmem:[%s1 + $0x798] sm:$0xff]
  %v269 = vld [vmem:[%s1 + $0x7a0] sm:$0xff]
  %v270 = vld [vmem:[%s1 + $0x7a8] sm:$0xff]
  %v271 = vld [vmem:[%s1 + $0x7b0] sm:$0xff]
  %v272 = vld [vmem:[%s1 + $0x7b8] sm:$0xff]
  %v273 = vld [vmem:[%s1 + $0x7c0] sm:$0xff]
  %v274 = vld [vmem:[%s1 + $0x7c8] sm:$0xff]
  %v275 = vld [vmem:[%s1 + $0x7d0] sm:$0xff]
  %v276 = vld [vmem:[%s1 + $0x7d8] sm:$0xff]
  %v277 = vld [vmem:[%s1 + $0x7e0] sm:$0xff]
  %v278 = vld [vmem:[%s1 + $0x7e8] sm:$0xff]
  %v279 = vld [vmem:[%s1 + $0x7f0] sm:$0xff]
  %v280 = vld [vmem:[%s1 + $0x7f8] sm:$0xff]
  %v281 = vld [vmem:[%s2] sm:$0xf]
  %v283 = vlaneseq
  %v284 = vshrl.u32 %v283, 7
  %v285 = vsub.s32 0, %v284
  %v286 = vrot.slane %v281, %v285
  %v287 = vlaneseq
  %v288 = vshrl.u32 %v287, 7
  %v289 = vsub.s32 1, %v288
  %v290 = vrot.slane %v281, %v289
  %v291 = vlaneseq
  %v292 = vshrl.u32 %v291, 7
  %v293 = vsub.s32 2, %v292
  %v294 = vrot.slane %v281, %v293
  %v295 = vlaneseq
  %v296 = vshrl.u32 %v295, 7
  %v297 = vsub.s32 3, %v296
  %v298 = vrot.slane %v281, %v297
  %v307 = vunpack.c.l.b16 %v21
  %v308 = vunpack.c.h.b16 %v21
  %v309 = vunpack.c.l.b16 %v22
  %v310 = vunpack.c.h.b16 %v22
  %v311 = vunpack.c.l.b16 %v23
  %v312 = vunpack.c.h.b16 %v23
  %v313 = vunpack.c.l.b16 %v24
  %v314 = vunpack.c.h.b16 %v24
  %v315 = vpack.c.b16 %v307, %v307
  %v316 = vpack.c.b16 %v308, %v308
  %v317 = vpack.c.b16 %v309, %v309
  %v318 = vpack.c.b16 %v310, %v310
  %v319 = vpack.c.b16 %v311, %v311
  %v320 = vpack.c.b16 %v312, %v312
  %v321 = vpack.c.b16 %v313, %v313
  %v322 = vpack.c.b16 %v314, %v314
  %v587 = vunpack.c.l.b16 %v25
  %v588 = vunpack.c.h.b16 %v25
  %v589 = vunpack.c.l.b16 %v26
  %v590 = vunpack.c.h.b16 %v26
  %v591 = vunpack.c.l.b16 %v27
  %v592 = vunpack.c.h.b16 %v27
  %v593 = vunpack.c.l.b16 %v28
  %v594 = vunpack.c.h.b16 %v28
  %v595 = vunpack.c.l.b16 %v29
  %v596 = vunpack.c.h.b16 %v29
  %v597 = vunpack.c.l.b16 %v30
  %v598 = vunpack.c.h.b16 %v30
  %v599 = vunpack.c.l.b16 %v31
  %v600 = vunpack.c.h.b16 %v31
  %v601 = vunpack.c.l.b16 %v32
  %v602 = vunpack.c.h.b16 %v32
  %v603 = vunpack.c.l.b16 %v33
  %v604 = vunpack.c.h.b16 %v33
  %v605 = vunpack.c.l.b16 %v34
  %v606 = vunpack.c.h.b16 %v34
  %v607 = vunpack.c.l.b16 %v35
  %v608 = vunpack.c.h.b16 %v35
  %v609 = vunpack.c.l.b16 %v36
  %v610 = vunpack.c.h.b16 %v36
  %v611 = vunpack.c.l.b16 %v37
  %v612 = vunpack.c.h.b16 %v37
  %v613 = vunpack.c.l.b16 %v38
  %v614 = vunpack.c.h.b16 %v38
  %v615 = vunpack.c.l.b16 %v39
  %v616 = vunpack.c.h.b16 %v39
  %v617 = vunpack.c.l.b16 %v40
  %v618 = vunpack.c.h.b16 %v40
  %v619 = vunpack.c.l.b16 %v41
  %v620 = vunpack.c.h.b16 %v41
  %v621 = vunpack.c.l.b16 %v42
  %v622 = vunpack.c.h.b16 %v42
  %v623 = vunpack.c.l.b16 %v43
  %v624 = vunpack.c.h.b16 %v43
  %v625 = vunpack.c.l.b16 %v44
  %v626 = vunpack.c.h.b16 %v44
  %v627 = vunpack.c.l.b16 %v45
  %v628 = vunpack.c.h.b16 %v45
  %v629 = vunpack.c.l.b16 %v46
  %v630 = vunpack.c.h.b16 %v46
  %v631 = vunpack.c.l.b16 %v47
  %v632 = vunpack.c.h.b16 %v47
  %v633 = vunpack.c.l.b16 %v48
  %v634 = vunpack.c.h.b16 %v48
  %v635 = vunpack.c.l.b16 %v49
  %v636 = vunpack.c.h.b16 %v49
  %v637 = vunpack.c.l.b16 %v50
  %v638 = vunpack.c.h.b16 %v50
  %v639 = vunpack.c.l.b16 %v51
  %v640 = vunpack.c.h.b16 %v51
  %v641 = vunpack.c.l.b16 %v52
  %v642 = vunpack.c.h.b16 %v52
  %v643 = vunpack.c.l.b16 %v53
  %v644 = vunpack.c.h.b16 %v53
  %v645 = vunpack.c.l.b16 %v54
  %v646 = vunpack.c.h.b16 %v54
  %v647 = vunpack.c.l.b16 %v55
  %v648 = vunpack.c.h.b16 %v55
  %v649 = vunpack.c.l.b16 %v56
  %v650 = vunpack.c.h.b16 %v56
  %v651 = vunpack.c.l.b16 %v57
  %v652 = vunpack.c.h.b16 %v57
  %v653 = vunpack.c.l.b16 %v58
  %v654 = vunpack.c.h.b16 %v58
  %v655 = vunpack.c.l.b16 %v59
  %v656 = vunpack.c.h.b16 %v59
  %v657 = vunpack.c.l.b16 %v60
  %v658 = vunpack.c.h.b16 %v60
  %v659 = vunpack.c.l.b16 %v61
  %v660 = vunpack.c.h.b16 %v61
  %v661 = vunpack.c.l.b16 %v62
  %v662 = vunpack.c.h.b16 %v62
  %v663 = vunpack.c.l.b16 %v63
  %v664 = vunpack.c.h.b16 %v63
  %v665 = vunpack.c.l.b16 %v64
  %v666 = vunpack.c.h.b16 %v64
  %v667 = vunpack.c.l.b16 %v65
  %v668 = vunpack.c.h.b16 %v65
  %v669 = vunpack.c.l.b16 %v66
  %v670 = vunpack.c.h.b16 %v66
  %v671 = vunpack.c.l.b16 %v67
  %v672 = vunpack.c.h.b16 %v67
  %v673 = vunpack.c.l.b16 %v68
  %v674 = vunpack.c.h.b16 %v68
  %v675 = vunpack.c.l.b16 %v69
  %v676 = vunpack.c.h.b16 %v69
  %v677 = vunpack.c.l.b16 %v70
  %v678 = vunpack.c.h.b16 %v70
  %v679 = vunpack.c.l.b16 %v71
  %v680 = vunpack.c.h.b16 %v71
  %v681 = vunpack.c.l.b16 %v72
  %v682 = vunpack.c.h.b16 %v72
  %v683 = vunpack.c.l.b16 %v73
  %v684 = vunpack.c.h.b16 %v73
  %v685 = vunpack.c.l.b16 %v74
  %v686 = vunpack.c.h.b16 %v74
  %v687 = vunpack.c.l.b16 %v75
  %v688 = vunpack.c.h.b16 %v75
  %v689 = vunpack.c.l.b16 %v76
  %v690 = vunpack.c.h.b16 %v76
  %v691 = vunpack.c.l.b16 %v77
  %v692 = vunpack.c.h.b16 %v77
  %v693 = vunpack.c.l.b16 %v78
  %v694 = vunpack.c.h.b16 %v78
  %v695 = vunpack.c.l.b16 %v79
  %v696 = vunpack.c.h.b16 %v79
  %v697 = vunpack.c.l.b16 %v80
  %v698 = vunpack.c.h.b16 %v80
  %v699 = vunpack.c.l.b16 %v81
  %v700 = vunpack.c.h.b16 %v81
  %v701 = vunpack.c.l.b16 %v82
  %v702 = vunpack.c.h.b16 %v82
  %v703 = vunpack.c.l.b16 %v83
  %v704 = vunpack.c.h.b16 %v83
  %v705 = vunpack.c.l.b16 %v84
  %v706 = vunpack.c.h.b16 %v84
  %v707 = vunpack.c.l.b16 %v85
  %v708 = vunpack.c.h.b16 %v85
  %v709 = vunpack.c.l.b16 %v86
  %v710 = vunpack.c.h.b16 %v86
  %v711 = vunpack.c.l.b16 %v87
  %v712 = vunpack.c.h.b16 %v87
  %v713 = vunpack.c.l.b16 %v88
  %v714 = vunpack.c.h.b16 %v88
  %v715 = vunpack.c.l.b16 %v89
  %v716 = vunpack.c.h.b16 %v89
  %v717 = vunpack.c.l.b16 %v90
  %v718 = vunpack.c.h.b16 %v90
  %v719 = vunpack.c.l.b16 %v91
  %v720 = vunpack.c.h.b16 %v91
  %v721 = vunpack.c.l.b16 %v92
  %v722 = vunpack.c.h.b16 %v92
  %v723 = vunpack.c.l.b16 %v93
  %v724 = vunpack.c.h.b16 %v93
  %v725 = vunpack.c.l.b16 %v94
  %v726 = vunpack.c.h.b16 %v94
  %v727 = vunpack.c.l.b16 %v95
  %v728 = vunpack.c.h.b16 %v95
  %v729 = vunpack.c.l.b16 %v96
  %v730 = vunpack.c.h.b16 %v96
  %v731 = vunpack.c.l.b16 %v97
  %v732 = vunpack.c.h.b16 %v97
  %v733 = vunpack.c.l.b16 %v98
  %v734 = vunpack.c.h.b16 %v98
  %v735 = vunpack.c.l.b16 %v99
  %v736 = vunpack.c.h.b16 %v99
  %v737 = vunpack.c.l.b16 %v100
  %v738 = vunpack.c.h.b16 %v100
  %v739 = vunpack.c.l.b16 %v101
  %v740 = vunpack.c.h.b16 %v101
  %v741 = vunpack.c.l.b16 %v102
  %v742 = vunpack.c.h.b16 %v102
  %v743 = vunpack.c.l.b16 %v103
  %v744 = vunpack.c.h.b16 %v103
  %v745 = vunpack.c.l.b16 %v104
  %v746 = vunpack.c.h.b16 %v104
  %v747 = vunpack.c.l.b16 %v105
  %v748 = vunpack.c.h.b16 %v105
  %v749 = vunpack.c.l.b16 %v106
  %v750 = vunpack.c.h.b16 %v106
  %v751 = vunpack.c.l.b16 %v107
  %v752 = vunpack.c.h.b16 %v107
  %v753 = vunpack.c.l.b16 %v108
  %v754 = vunpack.c.h.b16 %v108
  %v755 = vunpack.c.l.b16 %v109
  %v756 = vunpack.c.h.b16 %v109
  %v757 = vunpack.c.l.b16 %v110
  %v758 = vunpack.c.h.b16 %v110
  %v759 = vunpack.c.l.b16 %v111
  %v760 = vunpack.c.h.b16 %v111
  %v761 = vunpack.c.l.b16 %v112
  %v762 = vunpack.c.h.b16 %v112
  %v763 = vunpack.c.l.b16 %v113
  %v764 = vunpack.c.h.b16 %v113
  %v765 = vunpack.c.l.b16 %v114
  %v766 = vunpack.c.h.b16 %v114
  %v767 = vunpack.c.l.b16 %v115
  %v768 = vunpack.c.h.b16 %v115
  %v769 = vunpack.c.l.b16 %v116
  %v770 = vunpack.c.h.b16 %v116
  %v771 = vunpack.c.l.b16 %v117
  %v772 = vunpack.c.h.b16 %v117
  %v773 = vunpack.c.l.b16 %v118
  %v774 = vunpack.c.h.b16 %v118
  %v775 = vunpack.c.l.b16 %v119
  %v776 = vunpack.c.h.b16 %v119
  %v777 = vunpack.c.l.b16 %v120
  %v778 = vunpack.c.h.b16 %v120
  %v779 = vunpack.c.l.b16 %v121
  %v780 = vunpack.c.h.b16 %v121
  %v781 = vunpack.c.l.b16 %v122
  %v782 = vunpack.c.h.b16 %v122
  %v783 = vunpack.c.l.b16 %v123
  %v784 = vunpack.c.h.b16 %v123
  %v785 = vunpack.c.l.b16 %v124
  %v786 = vunpack.c.h.b16 %v124
  %v787 = vunpack.c.l.b16 %v125
  %v788 = vunpack.c.h.b16 %v125
  %v789 = vunpack.c.l.b16 %v126
  %v790 = vunpack.c.h.b16 %v126
  %v791 = vunpack.c.l.b16 %v127
  %v792 = vunpack.c.h.b16 %v127
  %v793 = vunpack.c.l.b16 %v128
  %v794 = vunpack.c.h.b16 %v128
  %v795 = vunpack.c.l.b16 %v129
  %v796 = vunpack.c.h.b16 %v129
  %v797 = vunpack.c.l.b16 %v130
  %v798 = vunpack.c.h.b16 %v130
  %v799 = vunpack.c.l.b16 %v131
  %v800 = vunpack.c.h.b16 %v131
  %v801 = vunpack.c.l.b16 %v132
  %v802 = vunpack.c.h.b16 %v132
  %v803 = vunpack.c.l.b16 %v133
  %v804 = vunpack.c.h.b16 %v133
  %v805 = vunpack.c.l.b16 %v134
  %v806 = vunpack.c.h.b16 %v134
  %v807 = vunpack.c.l.b16 %v135
  %v808 = vunpack.c.h.b16 %v135
  %v809 = vunpack.c.l.b16 %v136
  %v810 = vunpack.c.h.b16 %v136
  %v811 = vunpack.c.l.b16 %v137
  %v812 = vunpack.c.h.b16 %v137
  %v813 = vunpack.c.l.b16 %v138
  %v814 = vunpack.c.h.b16 %v138
  %v815 = vunpack.c.l.b16 %v139
  %v816 = vunpack.c.h.b16 %v139
  %v817 = vunpack.c.l.b16 %v140
  %v818 = vunpack.c.h.b16 %v140
  %v819 = vunpack.c.l.b16 %v141
  %v820 = vunpack.c.h.b16 %v141
  %v821 = vunpack.c.l.b16 %v142
  %v822 = vunpack.c.h.b16 %v142
  %v823 = vunpack.c.l.b16 %v143
  %v824 = vunpack.c.h.b16 %v143
  %v825 = vunpack.c.l.b16 %v144
  %v826 = vunpack.c.h.b16 %v144
  %v827 = vunpack.c.l.b16 %v145
  %v828 = vunpack.c.h.b16 %v145
  %v829 = vunpack.c.l.b16 %v146
  %v830 = vunpack.c.h.b16 %v146
  %v831 = vunpack.c.l.b16 %v147
  %v832 = vunpack.c.h.b16 %v147
  %v833 = vunpack.c.l.b16 %v148
  %v834 = vunpack.c.h.b16 %v148
  %v835 = vunpack.c.l.b16 %v149
  %v836 = vunpack.c.h.b16 %v149
  %v837 = vunpack.c.l.b16 %v150
  %v838 = vunpack.c.h.b16 %v150
  %v839 = vunpack.c.l.b16 %v151
  %v840 = vunpack.c.h.b16 %v151
  %v841 = vunpack.c.l.b16 %v152
  %v842 = vunpack.c.h.b16 %v152
  %v843 = vunpack.c.l.b16 %v153
  %v844 = vunpack.c.h.b16 %v153
  %v845 = vunpack.c.l.b16 %v154
  %v846 = vunpack.c.h.b16 %v154
  %v847 = vunpack.c.l.b16 %v155
  %v848 = vunpack.c.h.b16 %v155
  %v849 = vunpack.c.l.b16 %v156
  %v850 = vunpack.c.h.b16 %v156
  %v851 = vunpack.c.l.b16 %v157
  %v852 = vunpack.c.h.b16 %v157
  %v853 = vunpack.c.l.b16 %v158
  %v854 = vunpack.c.h.b16 %v158
  %v855 = vunpack.c.l.b16 %v159
  %v856 = vunpack.c.h.b16 %v159
  %v857 = vunpack.c.l.b16 %v160
  %v858 = vunpack.c.h.b16 %v160
  %v859 = vunpack.c.l.b16 %v161
  %v860 = vunpack.c.h.b16 %v161
  %v861 = vunpack.c.l.b16 %v162
  %v862 = vunpack.c.h.b16 %v162
  %v863 = vunpack.c.l.b16 %v163
  %v864 = vunpack.c.h.b16 %v163
  %v865 = vunpack.c.l.b16 %v164
  %v866 = vunpack.c.h.b16 %v164
  %v867 = vunpack.c.l.b16 %v165
  %v868 = vunpack.c.h.b16 %v165
  %v869 = vunpack.c.l.b16 %v166
  %v870 = vunpack.c.h.b16 %v166
  %v871 = vunpack.c.l.b16 %v167
  %v872 = vunpack.c.h.b16 %v167
  %v873 = vunpack.c.l.b16 %v168
  %v874 = vunpack.c.h.b16 %v168
  %v875 = vunpack.c.l.b16 %v169
  %v876 = vunpack.c.h.b16 %v169
  %v877 = vunpack.c.l.b16 %v170
  %v878 = vunpack.c.h.b16 %v170
  %v879 = vunpack.c.l.b16 %v171
  %v880 = vunpack.c.h.b16 %v171
  %v881 = vunpack.c.l.b16 %v172
  %v882 = vunpack.c.h.b16 %v172
  %v883 = vunpack.c.l.b16 %v173
  %v884 = vunpack.c.h.b16 %v173
  %v885 = vunpack.c.l.b16 %v174
  %v886 = vunpack.c.h.b16 %v174
  %v887 = vunpack.c.l.b16 %v175
  %v888 = vunpack.c.h.b16 %v175
  %v889 = vunpack.c.l.b16 %v176
  %v890 = vunpack.c.h.b16 %v176
  %v891 = vunpack.c.l.b16 %v177
  %v892 = vunpack.c.h.b16 %v177
  %v893 = vunpack.c.l.b16 %v178
  %v894 = vunpack.c.h.b16 %v178
  %v895 = vunpack.c.l.b16 %v179
  %v896 = vunpack.c.h.b16 %v179
  %v897 = vunpack.c.l.b16 %v180
  %v898 = vunpack.c.h.b16 %v180
  %v899 = vunpack.c.l.b16 %v181
  %v900 = vunpack.c.h.b16 %v181
  %v901 = vunpack.c.l.b16 %v182
  %v902 = vunpack.c.h.b16 %v182
  %v903 = vunpack.c.l.b16 %v183
  %v904 = vunpack.c.h.b16 %v183
  %v905 = vunpack.c.l.b16 %v184
  %v906 = vunpack.c.h.b16 %v184
  %v907 = vunpack.c.l.b16 %v185
  %v908 = vunpack.c.h.b16 %v185
  %v909 = vunpack.c.l.b16 %v186
  %v910 = vunpack.c.h.b16 %v186
  %v911 = vunpack.c.l.b16 %v187
  %v912 = vunpack.c.h.b16 %v187
  %v913 = vunpack.c.l.b16 %v188
  %v914 = vunpack.c.h.b16 %v188
  %v915 = vunpack.c.l.b16 %v189
  %v916 = vunpack.c.h.b16 %v189
  %v917 = vunpack.c.l.b16 %v190
  %v918 = vunpack.c.h.b16 %v190
  %v919 = vunpack.c.l.b16 %v191
  %v920 = vunpack.c.h.b16 %v191
  %v921 = vunpack.c.l.b16 %v192
  %v922 = vunpack.c.h.b16 %v192
  %v923 = vunpack.c.l.b16 %v193
  %v924 = vunpack.c.h.b16 %v193
  %v925 = vunpack.c.l.b16 %v194
  %v926 = vunpack.c.h.b16 %v194
  %v927 = vunpack.c.l.b16 %v195
  %v928 = vunpack.c.h.b16 %v195
  %v929 = vunpack.c.l.b16 %v196
  %v930 = vunpack.c.h.b16 %v196
  %v931 = vunpack.c.l.b16 %v197
  %v932 = vunpack.c.h.b16 %v197
  %v933 = vunpack.c.l.b16 %v198
  %v934 = vunpack.c.h.b16 %v198
  %v935 = vunpack.c.l.b16 %v199
  %v936 = vunpack.c.h.b16 %v199
  %v937 = vunpack.c.l.b16 %v200
  %v938 = vunpack.c.h.b16 %v200
  %v939 = vunpack.c.l.b16 %v201
  %v940 = vunpack.c.h.b16 %v201
  %v941 = vunpack.c.l.b16 %v202
  %v942 = vunpack.c.h.b16 %v202
  %v943 = vunpack.c.l.b16 %v203
  %v944 = vunpack.c.h.b16 %v203
  %v945 = vunpack.c.l.b16 %v204
  %v946 = vunpack.c.h.b16 %v204
  %v947 = vunpack.c.l.b16 %v205
  %v948 = vunpack.c.h.b16 %v205
  %v949 = vunpack.c.l.b16 %v206
  %v950 = vunpack.c.h.b16 %v206
  %v951 = vunpack.c.l.b16 %v207
  %v952 = vunpack.c.h.b16 %v207
  %v953 = vunpack.c.l.b16 %v208
  %v954 = vunpack.c.h.b16 %v208
  %v955 = vunpack.c.l.b16 %v209
  %v956 = vunpack.c.h.b16 %v209
  %v957 = vunpack.c.l.b16 %v210
  %v958 = vunpack.c.h.b16 %v210
  %v959 = vunpack.c.l.b16 %v211
  %v960 = vunpack.c.h.b16 %v211
  %v961 = vunpack.c.l.b16 %v212
  %v962 = vunpack.c.h.b16 %v212
  %v963 = vunpack.c.l.b16 %v213
  %v964 = vunpack.c.h.b16 %v213
  %v965 = vunpack.c.l.b16 %v214
  %v966 = vunpack.c.h.b16 %v214
  %v967 = vunpack.c.l.b16 %v215
  %v968 = vunpack.c.h.b16 %v215
  %v969 = vunpack.c.l.b16 %v216
  %v970 = vunpack.c.h.b16 %v216
  %v971 = vunpack.c.l.b16 %v217
  %v972 = vunpack.c.h.b16 %v217
  %v973 = vunpack.c.l.b16 %v218
  %v974 = vunpack.c.h.b16 %v218
  %v975 = vunpack.c.l.b16 %v219
  %v976 = vunpack.c.h.b16 %v219
  %v977 = vunpack.c.l.b16 %v220
  %v978 = vunpack.c.h.b16 %v220
  %v979 = vunpack.c.l.b16 %v221
  %v980 = vunpack.c.h.b16 %v221
  %v981 = vunpack.c.l.b16 %v222
  %v982 = vunpack.c.h.b16 %v222
  %v983 = vunpack.c.l.b16 %v223
  %v984 = vunpack.c.h.b16 %v223
  %v985 = vunpack.c.l.b16 %v224
  %v986 = vunpack.c.h.b16 %v224
  %v987 = vunpack.c.l.b16 %v225
  %v988 = vunpack.c.h.b16 %v225
  %v989 = vunpack.c.l.b16 %v226
  %v990 = vunpack.c.h.b16 %v226
  %v991 = vunpack.c.l.b16 %v227
  %v992 = vunpack.c.h.b16 %v227
  %v993 = vunpack.c.l.b16 %v228
  %v994 = vunpack.c.h.b16 %v228
  %v995 = vunpack.c.l.b16 %v229
  %v996 = vunpack.c.h.b16 %v229
  %v997 = vunpack.c.l.b16 %v230
  %v998 = vunpack.c.h.b16 %v230
  %v999 = vunpack.c.l.b16 %v231
  %v1000 = vunpack.c.h.b16 %v231
  %v1001 = vunpack.c.l.b16 %v232
  %v1002 = vunpack.c.h.b16 %v232
  %v1003 = vunpack.c.l.b16 %v233
  %v1004 = vunpack.c.h.b16 %v233
  %v1005 = vunpack.c.l.b16 %v234
  %v1006 = vunpack.c.h.b16 %v234
  %v1007 = vunpack.c.l.b16 %v235
  %v1008 = vunpack.c.h.b16 %v235
  %v1009 = vunpack.c.l.b16 %v236
  %v1010 = vunpack.c.h.b16 %v236
  %v1011 = vunpack.c.l.b16 %v237
  %v1012 = vunpack.c.h.b16 %v237
  %v1013 = vunpack.c.l.b16 %v238
  %v1014 = vunpack.c.h.b16 %v238
  %v1015 = vunpack.c.l.b16 %v239
  %v1016 = vunpack.c.h.b16 %v239
  %v1017 = vunpack.c.l.b16 %v240
  %v1018 = vunpack.c.h.b16 %v240
  %v1019 = vunpack.c.l.b16 %v241
  %v1020 = vunpack.c.h.b16 %v241
  %v1021 = vunpack.c.l.b16 %v242
  %v1022 = vunpack.c.h.b16 %v242
  %v1023 = vunpack.c.l.b16 %v243
  %v1024 = vunpack.c.h.b16 %v243
  %v1025 = vunpack.c.l.b16 %v244
  %v1026 = vunpack.c.h.b16 %v244
  %v1027 = vunpack.c.l.b16 %v245
  %v1028 = vunpack.c.h.b16 %v245
  %v1029 = vunpack.c.l.b16 %v246
  %v1030 = vunpack.c.h.b16 %v246
  %v1031 = vunpack.c.l.b16 %v247
  %v1032 = vunpack.c.h.b16 %v247
  %v1033 = vunpack.c.l.b16 %v248
  %v1034 = vunpack.c.h.b16 %v248
  %v1035 = vunpack.c.l.b16 %v249
  %v1036 = vunpack.c.h.b16 %v249
  %v1037 = vunpack.c.l.b16 %v250
  %v1038 = vunpack.c.h.b16 %v250
  %v1039 = vunpack.c.l.b16 %v251
  %v1040 = vunpack.c.h.b16 %v251
  %v1041 = vunpack.c.l.b16 %v252
  %v1042 = vunpack.c.h.b16 %v252
  %v1043 = vunpack.c.l.b16 %v253
  %v1044 = vunpack.c.h.b16 %v253
  %v1045 = vunpack.c.l.b16 %v254
  %v1046 = vunpack.c.h.b16 %v254
  %v1047 = vunpack.c.l.b16 %v255
  %v1048 = vunpack.c.h.b16 %v255
  %v1049 = vunpack.c.l.b16 %v256
  %v1050 = vunpack.c.h.b16 %v256
  %v1051 = vunpack.c.l.b16 %v257
  %v1052 = vunpack.c.h.b16 %v257
  %v1053 = vunpack.c.l.b16 %v258
  %v1054 = vunpack.c.h.b16 %v258
  %v1055 = vunpack.c.l.b16 %v259
  %v1056 = vunpack.c.h.b16 %v259
  %v1057 = vunpack.c.l.b16 %v260
  %v1058 = vunpack.c.h.b16 %v260
  %v1059 = vunpack.c.l.b16 %v261
  %v1060 = vunpack.c.h.b16 %v261
  %v1061 = vunpack.c.l.b16 %v262
  %v1062 = vunpack.c.h.b16 %v262
  %v1063 = vunpack.c.l.b16 %v263
  %v1064 = vunpack.c.h.b16 %v263
  %v1065 = vunpack.c.l.b16 %v264
  %v1066 = vunpack.c.h.b16 %v264
  %v1067 = vunpack.c.l.b16 %v265
  %v1068 = vunpack.c.h.b16 %v265
  %v1069 = vunpack.c.l.b16 %v266
  %v1070 = vunpack.c.h.b16 %v266
  %v1071 = vunpack.c.l.b16 %v267
  %v1072 = vunpack.c.h.b16 %v267
  %v1073 = vunpack.c.l.b16 %v268
  %v1074 = vunpack.c.h.b16 %v268
  %v1075 = vunpack.c.l.b16 %v269
  %v1076 = vunpack.c.h.b16 %v269
  %v1077 = vunpack.c.l.b16 %v270
  %v1078 = vunpack.c.h.b16 %v270
  %v1079 = vunpack.c.l.b16 %v271
  %v1080 = vunpack.c.h.b16 %v271
  %v1081 = vunpack.c.l.b16 %v272
  %v1082 = vunpack.c.h.b16 %v272
  %v1083 = vunpack.c.l.b16 %v273
  %v1084 = vunpack.c.h.b16 %v273
  %v1085 = vunpack.c.l.b16 %v274
  %v1086 = vunpack.c.h.b16 %v274
  %v1087 = vunpack.c.l.b16 %v275
  %v1088 = vunpack.c.h.b16 %v275
  %v1089 = vunpack.c.l.b16 %v276
  %v1090 = vunpack.c.h.b16 %v276
  %v1091 = vunpack.c.l.b16 %v277
  %v1092 = vunpack.c.h.b16 %v277
  %v1093 = vunpack.c.l.b16 %v278
  %v1094 = vunpack.c.h.b16 %v278
  %v1095 = vunpack.c.l.b16 %v279
  %v1096 = vunpack.c.h.b16 %v279
  %v1097 = vunpack.c.l.b16 %v280
  %v1098 = vunpack.c.h.b16 %v280
  %v1099 = vpack.c.b16 %v591, %v587
  %v1100 = vpack.c.b16 %v592, %v588
  %v1101 = vpack.c.b16 %v593, %v589
  %v1102 = vpack.c.b16 %v594, %v590
  %v1103 = vpack.c.b16 %v599, %v595
  %v1104 = vpack.c.b16 %v600, %v596
  %v1105 = vpack.c.b16 %v601, %v597
  %v1106 = vpack.c.b16 %v602, %v598
  %v1107 = vpack.c.b16 %v607, %v603
  %v1108 = vpack.c.b16 %v608, %v604
  %v1109 = vpack.c.b16 %v609, %v605
  %v1110 = vpack.c.b16 %v610, %v606
  %v1111 = vpack.c.b16 %v615, %v611
  %v1112 = vpack.c.b16 %v616, %v612
  %v1113 = vpack.c.b16 %v617, %v613
  %v1114 = vpack.c.b16 %v618, %v614
  %v1115 = vpack.c.b16 %v623, %v619
  %v1116 = vpack.c.b16 %v624, %v620
  %v1117 = vpack.c.b16 %v625, %v621
  %v1118 = vpack.c.b16 %v626, %v622
  %v1119 = vpack.c.b16 %v631, %v627
  %v1120 = vpack.c.b16 %v632, %v628
  %v1121 = vpack.c.b16 %v633, %v629
  %v1122 = vpack.c.b16 %v634, %v630
  %v1123 = vpack.c.b16 %v639, %v635
  %v1124 = vpack.c.b16 %v640, %v636
  %v1125 = vpack.c.b16 %v641, %v637
  %v1126 = vpack.c.b16 %v642, %v638
  %v1127 = vpack.c.b16 %v647, %v643
  %v1128 = vpack.c.b16 %v648, %v644
  %v1129 = vpack.c.b16 %v649, %v645
  %v1130 = vpack.c.b16 %v650, %v646
  %v1131 = vpack.c.b16 %v655, %v651
  %v1132 = vpack.c.b16 %v656, %v652
  %v1133 = vpack.c.b16 %v657, %v653
  %v1134 = vpack.c.b16 %v658, %v654
  %v1135 = vpack.c.b16 %v663, %v659
  %v1136 = vpack.c.b16 %v664, %v660
  %v1137 = vpack.c.b16 %v665, %v661
  %v1138 = vpack.c.b16 %v666, %v662
  %v1139 = vpack.c.b16 %v671, %v667
  %v1140 = vpack.c.b16 %v672, %v668
  %v1141 = vpack.c.b16 %v673, %v669
  %v1142 = vpack.c.b16 %v674, %v670
  %v1143 = vpack.c.b16 %v679, %v675
  %v1144 = vpack.c.b16 %v680, %v676
  %v1145 = vpack.c.b16 %v681, %v677
  %v1146 = vpack.c.b16 %v682, %v678
  %v1147 = vpack.c.b16 %v687, %v683
  %v1148 = vpack.c.b16 %v688, %v684
  %v1149 = vpack.c.b16 %v689, %v685
  %v1150 = vpack.c.b16 %v690, %v686
  %v1151 = vpack.c.b16 %v695, %v691
  %v1152 = vpack.c.b16 %v696, %v692
  %v1153 = vpack.c.b16 %v697, %v693
  %v1154 = vpack.c.b16 %v698, %v694
  %v1155 = vpack.c.b16 %v703, %v699
  %v1156 = vpack.c.b16 %v704, %v700
  %v1157 = vpack.c.b16 %v705, %v701
  %v1158 = vpack.c.b16 %v706, %v702
  %v1159 = vpack.c.b16 %v711, %v707
  %v1160 = vpack.c.b16 %v712, %v708
  %v1161 = vpack.c.b16 %v713, %v709
  %v1162 = vpack.c.b16 %v714, %v710
  %v1163 = vpack.c.b16 %v719, %v715
  %v1164 = vpack.c.b16 %v720, %v716
  %v1165 = vpack.c.b16 %v721, %v717
  %v1166 = vpack.c.b16 %v722, %v718
  %v1167 = vpack.c.b16 %v727, %v723
  %v1168 = vpack.c.b16 %v728, %v724
  %v1169 = vpack.c.b16 %v729, %v725
  %v1170 = vpack.c.b16 %v730, %v726
  %v1171 = vpack.c.b16 %v735, %v731
  %v1172 = vpack.c.b16 %v736, %v732
  %v1173 = vpack.c.b16 %v737, %v733
  %v1174 = vpack.c.b16 %v738, %v734
  %v1175 = vpack.c.b16 %v743, %v739
  %v1176 = vpack.c.b16 %v744, %v740
  %v1177 = vpack.c.b16 %v745, %v741
  %v1178 = vpack.c.b16 %v746, %v742
  %v1179 = vpack.c.b16 %v751, %v747
  %v1180 = vpack.c.b16 %v752, %v748
  %v1181 = vpack.c.b16 %v753, %v749
  %v1182 = vpack.c.b16 %v754, %v750
  %v1183 = vpack.c.b16 %v759, %v755
  %v1184 = vpack.c.b16 %v760, %v756
  %v1185 = vpack.c.b16 %v761, %v757
  %v1186 = vpack.c.b16 %v762, %v758
  %v1187 = vpack.c.b16 %v767, %v763
  %v1188 = vpack.c.b16 %v768, %v764
  %v1189 = vpack.c.b16 %v769, %v765
  %v1190 = vpack.c.b16 %v770, %v766
  %v1191 = vpack.c.b16 %v775, %v771
  %v1192 = vpack.c.b16 %v776, %v772
  %v1193 = vpack.c.b16 %v777, %v773
  %v1194 = vpack.c.b16 %v778, %v774
  %v1195 = vpack.c.b16 %v783, %v779
  %v1196 = vpack.c.b16 %v784, %v780
  %v1197 = vpack.c.b16 %v785, %v781
  %v1198 = vpack.c.b16 %v786, %v782
  %v1199 = vpack.c.b16 %v791, %v787
  %v1200 = vpack.c.b16 %v792, %v788
  %v1201 = vpack.c.b16 %v793, %v789
  %v1202 = vpack.c.b16 %v794, %v790
  %v1203 = vpack.c.b16 %v799, %v795
  %v1204 = vpack.c.b16 %v800, %v796
  %v1205 = vpack.c.b16 %v801, %v797
  %v1206 = vpack.c.b16 %v802, %v798
  %v1207 = vpack.c.b16 %v807, %v803
  %v1208 = vpack.c.b16 %v808, %v804
  %v1209 = vpack.c.b16 %v809, %v805
  %v1210 = vpack.c.b16 %v810, %v806
  %v1211 = vpack.c.b16 %v815, %v811
  %v1212 = vpack.c.b16 %v816, %v812
  %v1213 = vpack.c.b16 %v817, %v813
  %v1214 = vpack.c.b16 %v818, %v814
  %v1215 = vpack.c.b16 %v823, %v819
  %v1216 = vpack.c.b16 %v824, %v820
  %v1217 = vpack.c.b16 %v825, %v821
  %v1218 = vpack.c.b16 %v826, %v822
  %v1219 = vpack.c.b16 %v831, %v827
  %v1220 = vpack.c.b16 %v832, %v828
  %v1221 = vpack.c.b16 %v833, %v829
  %v1222 = vpack.c.b16 %v834, %v830
  %v1223 = vpack.c.b16 %v839, %v835
  %v1224 = vpack.c.b16 %v840, %v836
  %v1225 = vpack.c.b16 %v841, %v837
  %v1226 = vpack.c.b16 %v842, %v838
  %v1227 = vpack.c.b16 %v847, %v843
  %v1228 = vpack.c.b16 %v848, %v844
  %v1229 = vpack.c.b16 %v849, %v845
  %v1230 = vpack.c.b16 %v850, %v846
  %v1231 = vpack.c.b16 %v855, %v851
  %v1232 = vpack.c.b16 %v856, %v852
  %v1233 = vpack.c.b16 %v857, %v853
  %v1234 = vpack.c.b16 %v858, %v854
  %v1235 = vpack.c.b16 %v863, %v859
  %v1236 = vpack.c.b16 %v864, %v860
  %v1237 = vpack.c.b16 %v865, %v861
  %v1238 = vpack.c.b16 %v866, %v862
  %v1239 = vpack.c.b16 %v871, %v867
  %v1240 = vpack.c.b16 %v872, %v868
  %v1241 = vpack.c.b16 %v873, %v869
  %v1242 = vpack.c.b16 %v874, %v870
  %v1243 = vpack.c.b16 %v879, %v875
  %v1244 = vpack.c.b16 %v880, %v876
  %v1245 = vpack.c.b16 %v881, %v877
  %v1246 = vpack.c.b16 %v882, %v878
  %v1247 = vpack.c.b16 %v887, %v883
  %v1248 = vpack.c.b16 %v888, %v884
  %v1249 = vpack.c.b16 %v889, %v885
  %v1250 = vpack.c.b16 %v890, %v886
  %v1251 = vpack.c.b16 %v895, %v891
  %v1252 = vpack.c.b16 %v896, %v892
  %v1253 = vpack.c.b16 %v897, %v893
  %v1254 = vpack.c.b16 %v898, %v894
  %v1255 = vpack.c.b16 %v903, %v899
  %v1256 = vpack.c.b16 %v904, %v900
  %v1257 = vpack.c.b16 %v905, %v901
  %v1258 = vpack.c.b16 %v906, %v902
  %v1259 = vpack.c.b16 %v911, %v907
  %v1260 = vpack.c.b16 %v912, %v908
  %v1261 = vpack.c.b16 %v913, %v909
  %v1262 = vpack.c.b16 %v914, %v910
  %v1263 = vpack.c.b16 %v919, %v915
  %v1264 = vpack.c.b16 %v920, %v916
  %v1265 = vpack.c.b16 %v921, %v917
  %v1266 = vpack.c.b16 %v922, %v918
  %v1267 = vpack.c.b16 %v927, %v923
  %v1268 = vpack.c.b16 %v928, %v924
  %v1269 = vpack.c.b16 %v929, %v925
  %v1270 = vpack.c.b16 %v930, %v926
  %v1271 = vpack.c.b16 %v935, %v931
  %v1272 = vpack.c.b16 %v936, %v932
  %v1273 = vpack.c.b16 %v937, %v933
  %v1274 = vpack.c.b16 %v938, %v934
  %v1275 = vpack.c.b16 %v943, %v939
  %v1276 = vpack.c.b16 %v944, %v940
  %v1277 = vpack.c.b16 %v945, %v941
  %v1278 = vpack.c.b16 %v946, %v942
  %v1279 = vpack.c.b16 %v951, %v947
  %v1280 = vpack.c.b16 %v952, %v948
  %v1281 = vpack.c.b16 %v953, %v949
  %v1282 = vpack.c.b16 %v954, %v950
  %v1283 = vpack.c.b16 %v959, %v955
  %v1284 = vpack.c.b16 %v960, %v956
  %v1285 = vpack.c.b16 %v961, %v957
  %v1286 = vpack.c.b16 %v962, %v958
  %v1287 = vpack.c.b16 %v967, %v963
  %v1288 = vpack.c.b16 %v968, %v964
  %v1289 = vpack.c.b16 %v969, %v965
  %v1290 = vpack.c.b16 %v970, %v966
  %v1291 = vpack.c.b16 %v975, %v971
  %v1292 = vpack.c.b16 %v976, %v972
  %v1293 = vpack.c.b16 %v977, %v973
  %v1294 = vpack.c.b16 %v978, %v974
  %v1295 = vpack.c.b16 %v983, %v979
  %v1296 = vpack.c.b16 %v984, %v980
  %v1297 = vpack.c.b16 %v985, %v981
  %v1298 = vpack.c.b16 %v986, %v982
  %v1299 = vpack.c.b16 %v991, %v987
  %v1300 = vpack.c.b16 %v992, %v988
  %v1301 = vpack.c.b16 %v993, %v989
  %v1302 = vpack.c.b16 %v994, %v990
  %v1303 = vpack.c.b16 %v999, %v995
  %v1304 = vpack.c.b16 %v1000, %v996
  %v1305 = vpack.c.b16 %v1001, %v997
  %v1306 = vpack.c.b16 %v1002, %v998
  %v1307 = vpack.c.b16 %v1007, %v1003
  %v1308 = vpack.c.b16 %v1008, %v1004
  %v1309 = vpack.c.b16 %v1009, %v1005
  %v1310 = vpack.c.b16 %v1010, %v1006
  %v1311 = vpack.c.b16 %v1015, %v1011
  %v1312 = vpack.c.b16 %v1016, %v1012
  %v1313 = vpack.c.b16 %v1017, %v1013
  %v1314 = vpack.c.b16 %v1018, %v1014
  %v1315 = vpack.c.b16 %v1023, %v1019
  %v1316 = vpack.c.b16 %v1024, %v1020
  %v1317 = vpack.c.b16 %v1025, %v1021
  %v1318 = vpack.c.b16 %v1026, %v1022
  %v1319 = vpack.c.b16 %v1031, %v1027
  %v1320 = vpack.c.b16 %v1032, %v1028
  %v1321 = vpack.c.b16 %v1033, %v1029
  %v1322 = vpack.c.b16 %v1034, %v1030
  %v1323 = vpack.c.b16 %v1039, %v1035
  %v1324 = vpack.c.b16 %v1040, %v1036
  %v1325 = vpack.c.b16 %v1041, %v1037
  %v1326 = vpack.c.b16 %v1042, %v1038
  %v1327 = vpack.c.b16 %v1047, %v1043
  %v1328 = vpack.c.b16 %v1048, %v1044
  %v1329 = vpack.c.b16 %v1049, %v1045
  %v1330 = vpack.c.b16 %v1050, %v1046
  %v1331 = vpack.c.b16 %v1055, %v1051
  %v1332 = vpack.c.b16 %v1056, %v1052
  %v1333 = vpack.c.b16 %v1057, %v1053
  %v1334 = vpack.c.b16 %v1058, %v1054
  %v1335 = vpack.c.b16 %v1063, %v1059
  %v1336 = vpack.c.b16 %v1064, %v1060
  %v1337 = vpack.c.b16 %v1065, %v1061
  %v1338 = vpack.c.b16 %v1066, %v1062
  %v1339 = vpack.c.b16 %v1071, %v1067
  %v1340 = vpack.c.b16 %v1072, %v1068
  %v1341 = vpack.c.b16 %v1073, %v1069
  %v1342 = vpack.c.b16 %v1074, %v1070
  %v1343 = vpack.c.b16 %v1079, %v1075
  %v1344 = vpack.c.b16 %v1080, %v1076
  %v1345 = vpack.c.b16 %v1081, %v1077
  %v1346 = vpack.c.b16 %v1082, %v1078
  %v1347 = vpack.c.b16 %v1087, %v1083
  %v1348 = vpack.c.b16 %v1088, %v1084
  %v1349 = vpack.c.b16 %v1089, %v1085
  %v1350 = vpack.c.b16 %v1090, %v1086
  %v1351 = vpack.c.b16 %v1095, %v1091
  %v1352 = vpack.c.b16 %v1096, %v1092
  %v1353 = vpack.c.b16 %v1097, %v1093
  %v1354 = vpack.c.b16 %v1098, %v1094
  %1611 = vmatprep.subr.bf16.mxu0 %v1100
  %1612 = vmatpush1.bf16.msra.mxu0 %v1099
  %1613 = vmatprep.subr.bf16.mxu0 %v1104
  %1614 = vmatpush1.bf16.msra.mxu0 %v1103
  %1615 = vmatprep.subr.bf16.mxu0 %v1108
  %1616 = vmatpush1.bf16.msra.mxu0 %v1107
  %1617 = vmatprep.subr.bf16.mxu0 %v1112
  %1618 = vmatpush1.bf16.msra.mxu0 %v1111
  %1619 = vmatprep.subr.bf16.mxu0 %v1116
  %1620 = vmatpush1.bf16.msra.mxu0 %v1115
  %1621 = vmatprep.subr.bf16.mxu0 %v1120
  %1622 = vmatpush1.bf16.msra.mxu0 %v1119
  %1623 = vmatprep.subr.bf16.mxu0 %v1124
  %1624 = vmatpush1.bf16.msra.mxu0 %v1123
  %1625 = vmatprep.subr.bf16.mxu0 %v1128
  %1626 = vmatpush1.bf16.msra.mxu0 %v1127
  %1627 = vmatprep.subr.bf16.mxu0 %v1132
  %1628 = vmatpush1.bf16.msra.mxu0 %v1131
  %1629 = vmatprep.subr.bf16.mxu0 %v1136
  %1630 = vmatpush1.bf16.msra.mxu0 %v1135
  %1631 = vmatprep.subr.bf16.mxu0 %v1140
  %1632 = vmatpush1.bf16.msra.mxu0 %v1139
  %1633 = vmatprep.subr.bf16.mxu0 %v1144
  %1634 = vmatpush1.bf16.msra.mxu0 %v1143
  %1635 = vmatprep.subr.bf16.mxu0 %v1148
  %1636 = vmatpush1.bf16.msra.mxu0 %v1147
  %1637 = vmatprep.subr.bf16.mxu0 %v1152
  %1638 = vmatpush1.bf16.msra.mxu0 %v1151
  %1639 = vmatprep.subr.bf16.mxu0 %v1156
  %1640 = vmatpush1.bf16.msra.mxu0 %v1155
  %1641 = vmatprep.subr.bf16.mxu0 %v1160
  %1642 = vmatpush1.bf16.msra.mxu0 %v1159
  %1643 = vmatprep.mubr.bf16.mxu0 %v316
  %1644 = vmatmul.mubr.bf16.gmra.mrb[0].mxu0 %v315
  %v1645 = vpop.f32.mrb[0].mxu0
  %v1646 = vadd.f32 %v286, %v1645
  %v1647 = vpop.f32.mrb[0].mxu0
  %v1648 = vadd.f32 %v290, %v1647
  %v1649 = vpop.f32.mrb[0].mxu0
  %v1650 = vpop.f32.mrb[0].mxu0
  %1651 = vdwg.mxu0
  %1652 = vmatprep.subr.bf16.mxu0 %v1164
  %1653 = vmatpush1.bf16.msra.mxu0 %v1163
  %1654 = vmatprep.subr.bf16.mxu0 %v1168
  %1655 = vmatpush1.bf16.msra.mxu0 %v1167
  %1656 = vmatprep.subr.bf16.mxu0 %v1172
  %1657 = vmatpush1.bf16.msra.mxu0 %v1171
  %1658 = vmatprep.subr.bf16.mxu0 %v1176
  %1659 = vmatpush1.bf16.msra.mxu0 %v1175
  %1660 = vmatprep.subr.bf16.mxu0 %v1180
  %1661 = vmatpush1.bf16.msra.mxu0 %v1179
  %1662 = vmatprep.subr.bf16.mxu0 %v1184
  %1663 = vmatpush1.bf16.msra.mxu0 %v1183
  %1664 = vmatprep.subr.bf16.mxu0 %v1188
  %1665 = vmatpush1.bf16.msra.mxu0 %v1187
  %1666 = vmatprep.subr.bf16.mxu0 %v1192
  %1667 = vmatpush1.bf16.msra.mxu0 %v1191
  %1668 = vmatprep.subr.bf16.mxu0 %v1196
  %1669 = vmatpush1.bf16.msra.mxu0 %v1195
  %1670 = vmatprep.subr.bf16.mxu0 %v1200
  %1671 = vmatpush1.bf16.msra.mxu0 %v1199
  %1672 = vmatprep.subr.bf16.mxu0 %v1204
  %1673 = vmatpush1.bf16.msra.mxu0 %v1203
  %1674 = vmatprep.subr.bf16.mxu0 %v1208
  %1675 = vmatpush1.bf16.msra.mxu0 %v1207
  %1676 = vmatprep.subr.bf16.mxu0 %v1212
  %1677 = vmatpush1.bf16.msra.mxu0 %v1211
  %1678 = vmatprep.subr.bf16.mxu0 %v1216
  %1679 = vmatpush1.bf16.msra.mxu0 %v1215
  %1680 = vmatprep.subr.bf16.mxu0 %v1220
  %1681 = vmatpush1.bf16.msra.mxu0 %v1219
  %1682 = vmatprep.subr.bf16.mxu0 %v1224
  %1683 = vmatpush1.bf16.msra.mxu0 %v1223
  %1684 = vmatprep.mubr.bf16.mxu0 %v318
  %1685 = vmatmul.mubr.bf16.gmra.mrb[0].mxu0 %v317
  %v1686 = vpop.f32.mrb[0].mxu0
  %v1687 = vadd.f32 %v1646, %v1686
  %v1688 = vpop.f32.mrb[0].mxu0
  %v1689 = vadd.f32 %v1648, %v1688
  %v1690 = vpop.f32.mrb[0].mxu0
  %v1691 = vpop.f32.mrb[0].mxu0
  %1692 = vdwg.mxu0
  %1693 = vmatprep.subr.bf16.mxu0 %v1228
  %1694 = vmatpush1.bf16.msra.mxu0 %v1227
  %1695 = vmatprep.subr.bf16.mxu0 %v1232
  %1696 = vmatpush1.bf16.msra.mxu0 %v1231
  %1697 = vmatprep.subr.bf16.mxu0 %v1236
  %1698 = vmatpush1.bf16.msra.mxu0 %v1235
  %1699 = vmatprep.subr.bf16.mxu0 %v1240
  %1700 = vmatpush1.bf16.msra.mxu0 %v1239
  %1701 = vmatprep.subr.bf16.mxu0 %v1244
  %1702 = vmatpush1.bf16.msra.mxu0 %v1243
  %1703 = vmatprep.subr.bf16.mxu0 %v1248
  %1704 = vmatpush1.bf16.msra.mxu0 %v1247
  %1705 = vmatprep.subr.bf16.mxu0 %v1252
  %1706 = vmatpush1.bf16.msra.mxu0 %v1251
  %1707 = vmatprep.subr.bf16.mxu0 %v1256
  %1708 = vmatpush1.bf16.msra.mxu0 %v1255
  %1709 = vmatprep.subr.bf16.mxu0 %v1260
  %1710 = vmatpush1.bf16.msra.mxu0 %v1259
  %1711 = vmatprep.subr.bf16.mxu0 %v1264
  %1712 = vmatpush1.bf16.msra.mxu0 %v1263
  %1713 = vmatprep.subr.bf16.mxu0 %v1268
  %1714 = vmatpush1.bf16.msra.mxu0 %v1267
  %1715 = vmatprep.subr.bf16.mxu0 %v1272
  %1716 = vmatpush1.bf16.msra.mxu0 %v1271
  %1717 = vmatprep.subr.bf16.mxu0 %v1276
  %1718 = vmatpush1.bf16.msra.mxu0 %v1275
  %1719 = vmatprep.subr.bf16.mxu0 %v1280
  %1720 = vmatpush1.bf16.msra.mxu0 %v1279
  %1721 = vmatprep.subr.bf16.mxu0 %v1284
  %1722 = vmatpush1.bf16.msra.mxu0 %v1283
  %1723 = vmatprep.subr.bf16.mxu0 %v1288
  %1724 = vmatpush1.bf16.msra.mxu0 %v1287
  %1725 = vmatprep.mubr.bf16.mxu0 %v320
  %1726 = vmatmul.mubr.bf16.gmra.mrb[0].mxu0 %v319
  %v1727 = vpop.f32.mrb[0].mxu0
  %v1728 = vadd.f32 %v1687, %v1727
  %v1729 = vpop.f32.mrb[0].mxu0
  %v1730 = vadd.f32 %v1689, %v1729
  %v1731 = vpop.f32.mrb[0].mxu0
  %v1732 = vpop.f32.mrb[0].mxu0
  %1733 = vdwg.mxu0
  %1734 = vmatprep.subr.bf16.mxu0 %v1292
  %1735 = vmatpush1.bf16.msra.mxu0 %v1291
  %1736 = vmatprep.subr.bf16.mxu0 %v1296
  %1737 = vmatpush1.bf16.msra.mxu0 %v1295
  %1738 = vmatprep.subr.bf16.mxu0 %v1300
  %1739 = vmatpush1.bf16.msra.mxu0 %v1299
  %1740 = vmatprep.subr.bf16.mxu0 %v1304
  %1741 = vmatpush1.bf16.msra.mxu0 %v1303
  %1742 = vmatprep.subr.bf16.mxu0 %v1308
  %1743 = vmatpush1.bf16.msra.mxu0 %v1307
  %1744 = vmatprep.subr.bf16.mxu0 %v1312
  %1745 = vmatpush1.bf16.msra.mxu0 %v1311
  %1746 = vmatprep.subr.bf16.mxu0 %v1316
  %1747 = vmatpush1.bf16.msra.mxu0 %v1315
  %1748 = vmatprep.subr.bf16.mxu0 %v1320
  %1749 = vmatpush1.bf16.msra.mxu0 %v1319
  %1750 = vmatprep.subr.bf16.mxu0 %v1324
  %1751 = vmatpush1.bf16.msra.mxu0 %v1323
  %1752 = vmatprep.subr.bf16.mxu0 %v1328
  %1753 = vmatpush1.bf16.msra.mxu0 %v1327
  %1754 = vmatprep.subr.bf16.mxu0 %v1332
  %1755 = vmatpush1.bf16.msra.mxu0 %v1331
  %1756 = vmatprep.subr.bf16.mxu0 %v1336
  %1757 = vmatpush1.bf16.msra.mxu0 %v1335
  %1758 = vmatprep.subr.bf16.mxu0 %v1340
  %1759 = vmatpush1.bf16.msra.mxu0 %v1339
  %1760 = vmatprep.subr.bf16.mxu0 %v1344
  %1761 = vmatpush1.bf16.msra.mxu0 %v1343
  %1762 = vmatprep.subr.bf16.mxu0 %v1348
  %1763 = vmatpush1.bf16.msra.mxu0 %v1347
  %1764 = vmatprep.subr.bf16.mxu0 %v1352
  %1765 = vmatpush1.bf16.msra.mxu0 %v1351
  %1766 = vmatprep.mubr.bf16.mxu0 %v322
  %1767 = vmatmul.mubr.bf16.gmra.mrb[0].mxu0 %v321
  %v1768 = vpop.f32.mrb[0].mxu0
  %v1769 = vadd.f32 %v1728, %v1768
  %v1770 = vpop.f32.mrb[0].mxu0
  %v1771 = vadd.f32 %v1730, %v1770
  %v1772 = vpop.f32.mrb[0].mxu0
  %v1773 = vpop.f32.mrb[0].mxu0
  %1774 = vdwg.mxu0
  %1775 = vmatprep.subr.bf16.mxu0 %v1102
  %1776 = vmatpush1.bf16.msra.mxu0 %v1101
  %1777 = vmatprep.subr.bf16.mxu0 %v1106
  %1778 = vmatpush1.bf16.msra.mxu0 %v1105
  %1779 = vmatprep.subr.bf16.mxu0 %v1110
  %1780 = vmatpush1.bf16.msra.mxu0 %v1109
  %1781 = vmatprep.subr.bf16.mxu0 %v1114
  %1782 = vmatpush1.bf16.msra.mxu0 %v1113
  %1783 = vmatprep.subr.bf16.mxu0 %v1118
  %1784 = vmatpush1.bf16.msra.mxu0 %v1117
  %1785 = vmatprep.subr.bf16.mxu0 %v1122
  %1786 = vmatpush1.bf16.msra.mxu0 %v1121
  %1787 = vmatprep.subr.bf16.mxu0 %v1126
  %1788 = vmatpush1.bf16.msra.mxu0 %v1125
  %1789 = vmatprep.subr.bf16.mxu0 %v1130
  %1790 = vmatpush1.bf16.msra.mxu0 %v1129
  %1791 = vmatprep.subr.bf16.mxu0 %v1134
  %1792 = vmatpush1.bf16.msra.mxu0 %v1133
  %1793 = vmatprep.subr.bf16.mxu0 %v1138
  %1794 = vmatpush1.bf16.msra.mxu0 %v1137
  %1795 = vmatprep.subr.bf16.mxu0 %v1142
  %1796 = vmatpush1.bf16.msra.mxu0 %v1141
  %1797 = vmatprep.subr.bf16.mxu0 %v1146
  %1798 = vmatpush1.bf16.msra.mxu0 %v1145
  %1799 = vmatprep.subr.bf16.mxu0 %v1150
  %1800 = vmatpush1.bf16.msra.mxu0 %v1149
  %1801 = vmatprep.subr.bf16.mxu0 %v1154
  %1802 = vmatpush1.bf16.msra.mxu0 %v1153
  %1803 = vmatprep.subr.bf16.mxu0 %v1158
  %1804 = vmatpush1.bf16.msra.mxu0 %v1157
  %1805 = vmatprep.subr.bf16.mxu0 %v1162
  %1806 = vmatpush1.bf16.msra.mxu0 %v1161
  %1807 = vmatprep.mubr.bf16.mxu0 %v316
  %1808 = vmatmul.mubr.bf16.gmra.mrb[0].mxu0 %v315
  %v1809 = vpop.f32.mrb[0].mxu0
  %v1810 = vadd.f32 %v294, %v1809
  %v1811 = vpop.f32.mrb[0].mxu0
  %v1812 = vadd.f32 %v298, %v1811
  %v1813 = vpop.f32.mrb[0].mxu0
  %v1814 = vpop.f32.mrb[0].mxu0
  %1815 = vdwg.mxu0
  %1816 = vmatprep.subr.bf16.mxu0 %v1166
  %1817 = vmatpush1.bf16.msra.mxu0 %v1165
  %1818 = vmatprep.subr.bf16.mxu0 %v1170
  %1819 = vmatpush1.bf16.msra.mxu0 %v1169
  %1820 = vmatprep.subr.bf16.mxu0 %v1174
  %1821 = vmatpush1.bf16.msra.mxu0 %v1173
  %1822 = vmatprep.subr.bf16.mxu0 %v1178
  %1823 = vmatpush1.bf16.msra.mxu0 %v1177
  %1824 = vmatprep.subr.bf16.mxu0 %v1182
  %1825 = vmatpush1.bf16.msra.mxu0 %v1181
  %1826 = vmatprep.subr.bf16.mxu0 %v1186
  %1827 = vmatpush1.bf16.msra.mxu0 %v1185
  %1828 = vmatprep.subr.bf16.mxu0 %v1190
  %1829 = vmatpush1.bf16.msra.mxu0 %v1189
  %1830 = vmatprep.subr.bf16.mxu0 %v1194
  %1831 = vmatpush1.bf16.msra.mxu0 %v1193
  %1832 = vmatprep.subr.bf16.mxu0 %v1198
  %1833 = vmatpush1.bf16.msra.mxu0 %v1197
  %1834 = vmatprep.subr.bf16.mxu0 %v1202
  %1835 = vmatpush1.bf16.msra.mxu0 %v1201
  %1836 = vmatprep.subr.bf16.mxu0 %v1206
  %1837 = vmatpush1.bf16.msra.mxu0 %v1205
  %1838 = vmatprep.subr.bf16.mxu0 %v1210
  %1839 = vmatpush1.bf16.msra.mxu0 %v1209
  %1840 = vmatprep.subr.bf16.mxu0 %v1214
  %1841 = vmatpush1.bf16.msra.mxu0 %v1213
  %1842 = vmatprep.subr.bf16.mxu0 %v1218
  %1843 = vmatpush1.bf16.msra.mxu0 %v1217
  %1844 = vmatprep.subr.bf16.mxu0 %v1222
  %1845 = vmatpush1.bf16.msra.mxu0 %v1221
  %1846 = vmatprep.subr.bf16.mxu0 %v1226
  %1847 = vmatpush1.bf16.msra.mxu0 %v1225
  %1848 = vmatprep.mubr.bf16.mxu0 %v318
  %1849 = vmatmul.mubr.bf16.gmra.mrb[0].mxu0 %v317
  %v1850 = vpop.f32.mrb[0].mxu0
  %v1851 = vadd.f32 %v1810, %v1850
  %v1852 = vpop.f32.mrb[0].mxu0
  %v1853 = vadd.f32 %v1812, %v1852
  %v1854 = vpop.f32.mrb[0].mxu0
  %v1855 = vpop.f32.mrb[0].mxu0
  %1856 = vdwg.mxu0
  %1857 = vmatprep.subr.bf16.mxu0 %v1230
  %1858 = vmatpush1.bf16.msra.mxu0 %v1229
  %1859 = vmatprep.subr.bf16.mxu0 %v1234
  %1860 = vmatpush1.bf16.msra.mxu0 %v1233
  %1861 = vmatprep.subr.bf16.mxu0 %v1238
  %1862 = vmatpush1.bf16.msra.mxu0 %v1237
  %1863 = vmatprep.subr.bf16.mxu0 %v1242
  %1864 = vmatpush1.bf16.msra.mxu0 %v1241
  %1865 = vmatprep.subr.bf16.mxu0 %v1246
  %1866 = vmatpush1.bf16.msra.mxu0 %v1245
  %1867 = vmatprep.subr.bf16.mxu0 %v1250
  %1868 = vmatpush1.bf16.msra.mxu0 %v1249
  %1869 = vmatprep.subr.bf16.mxu0 %v1254
  %1870 = vmatpush1.bf16.msra.mxu0 %v1253
  %1871 = vmatprep.subr.bf16.mxu0 %v1258
  %1872 = vmatpush1.bf16.msra.mxu0 %v1257
  %1873 = vmatprep.subr.bf16.mxu0 %v1262
  %1874 = vmatpush1.bf16.msra.mxu0 %v1261
  %1875 = vmatprep.subr.bf16.mxu0 %v1266
  %1876 = vmatpush1.bf16.msra.mxu0 %v1265
  %1877 = vmatprep.subr.bf16.mxu0 %v1270
  %1878 = vmatpush1.bf16.msra.mxu0 %v1269
  %1879 = vmatprep.subr.bf16.mxu0 %v1274
  %1880 = vmatpush1.bf16.msra.mxu0 %v1273
  %1881 = vmatprep.subr.bf16.mxu0 %v1278
  %1882 = vmatpush1.bf16.msra.mxu0 %v1277
  %1883 = vmatprep.subr.bf16.mxu0 %v1282
  %1884 = vmatpush1.bf16.msra.mxu0 %v1281
  %1885 = vmatprep.subr.bf16.mxu0 %v1286
  %1886 = vmatpush1.bf16.msra.mxu0 %v1285
  %1887 = vmatprep.subr.bf16.mxu0 %v1290
  %1888 = vmatpush1.bf16.msra.mxu0 %v1289
  %1889 = vmatprep.mubr.bf16.mxu0 %v320
  %1890 = vmatmul.mubr.bf16.gmra.mrb[0].mxu0 %v319
  %v1891 = vpop.f32.mrb[0].mxu0
  %v1892 = vadd.f32 %v1851, %v1891
  %v1893 = vpop.f32.mrb[0].mxu0
  %v1894 = vadd.f32 %v1853, %v1893
  %v1895 = vpop.f32.mrb[0].mxu0
  %v1896 = vpop.f32.mrb[0].mxu0
  %1897 = vdwg.mxu0
  %1898 = vmatprep.subr.bf16.mxu0 %v1294
  %1899 = vmatpush1.bf16.msra.mxu0 %v1293
  %1900 = vmatprep.subr.bf16.mxu0 %v1298
  %1901 = vmatpush1.bf16.msra.mxu0 %v1297
  %1902 = vmatprep.subr.bf16.mxu0 %v1302
  %1903 = vmatpush1.bf16.msra.mxu0 %v1301
  %1904 = vmatprep.subr.bf16.mxu0 %v1306
  %1905 = vmatpush1.bf16.msra.mxu0 %v1305
  %1906 = vmatprep.subr.bf16.mxu0 %v1310
  %1907 = vmatpush1.bf16.msra.mxu0 %v1309
  %1908 = vmatprep.subr.bf16.mxu0 %v1314
  %1909 = vmatpush1.bf16.msra.mxu0 %v1313
  %1910 = vmatprep.subr.bf16.mxu0 %v1318
  %1911 = vmatpush1.bf16.msra.mxu0 %v1317
  %1912 = vmatprep.subr.bf16.mxu0 %v1322
  %1913 = vmatpush1.bf16.msra.mxu0 %v1321
  %1914 = vmatprep.subr.bf16.mxu0 %v1326
  %1915 = vmatpush1.bf16.msra.mxu0 %v1325
  %1916 = vmatprep.subr.bf16.mxu0 %v1330
  %1917 = vmatpush1.bf16.msra.mxu0 %v1329
  %1918 = vmatprep.subr.bf16.mxu0 %v1334
  %1919 = vmatpush1.bf16.msra.mxu0 %v1333
  %1920 = vmatprep.subr.bf16.mxu0 %v1338
  %1921 = vmatpush1.bf16.msra.mxu0 %v1337
  %1922 = vmatprep.subr.bf16.mxu0 %v1342
  %1923 = vmatpush1.bf16.msra.mxu0 %v1341
  %1924 = vmatprep.subr.bf16.mxu0 %v1346
  %1925 = vmatpush1.bf16.msra.mxu0 %v1345
  %1926 = vmatprep.subr.bf16.mxu0 %v1350
  %1927 = vmatpush1.bf16.msra.mxu0 %v1349
  %1928 = vmatprep.subr.bf16.mxu0 %v1354
  %1929 = vmatpush1.bf16.msra.mxu0 %v1353
  %1930 = vmatprep.mubr.bf16.mxu0 %v322
  %1931 = vmatmul.mubr.bf16.gmra.mrb[0].mxu0 %v321
  %v1932 = vpop.f32.mrb[0].mxu0
  %v1933 = vadd.f32 %v1892, %v1932
  %v1934 = vpop.f32.mrb[0].mxu0
  %v1935 = vadd.f32 %v1894, %v1934
  %v1936 = vpop.f32.mrb[0].mxu0
  %v1937 = vpop.f32.mrb[0].mxu0
  %1938 = vdwg.mxu0
  %v1939 = vmax.f32 %v1769, 0.0
  %v1940 = vmax.f32 %v1771, 0.0
  %v1941 = vmax.f32 %v1933, 0.0
  %v1942 = vmax.f32 %v1935, 0.0
  %v1943 = vpack.c.bf16 %v1939, %v1939
  %v1944 = vpack.c.bf16 %v1940, %v1940
  %v1945 = vpack.c.bf16 %v1941, %v1941
  %v1946 = vpack.c.bf16 %v1942, %v1942
  %v1947 = vld [vmem:[%s3] sm:$0xf]
  %v1948 = vld [vmem:[%s3 + $0x4] sm:$0xf]
  %v1949 = vld [vmem:[%s3 + $0x8] sm:$0xf]
  %v1950 = vld [vmem:[%s3 + $0xc] sm:$0xf]
  %v1951 = vld [vmem:[%s3 + $0x10] sm:$0xf]
  %v1952 = vld [vmem:[%s3 + $0x14] sm:$0xf]
  %v1953 = vld [vmem:[%s3 + $0x18] sm:$0xf]
  %v1954 = vld [vmem:[%s3 + $0x1c] sm:$0xf]
  %v1955 = vld [vmem:[%s3 + $0x20] sm:$0xf]
  %v1956 = vld [vmem:[%s3 + $0x24] sm:$0xf]
  %v1957 = vld [vmem:[%s3 + $0x28] sm:$0xf]
  %v1958 = vld [vmem:[%s3 + $0x2c] sm:$0xf]
  %v1959 = vld [vmem:[%s3 + $0x30] sm:$0xf]
  %v1960 = vld [vmem:[%s3 + $0x34] sm:$0xf]
  %v1961 = vld [vmem:[%s3 + $0x38] sm:$0xf]
  %v1962 = vld [vmem:[%s3 + $0x3c] sm:$0xf]
  %v1963 = vld [vmem:[%s3 + $0x40] sm:$0xf]
  %v1964 = vld [vmem:[%s3 + $0x44] sm:$0xf]
  %v1965 = vld [vmem:[%s3 + $0x48] sm:$0xf]
  %v1966 = vld [vmem:[%s3 + $0x4c] sm:$0xf]
  %v1967 = vld [vmem:[%s3 + $0x50] sm:$0xf]
  %v1968 = vld [vmem:[%s3 + $0x54] sm:$0xf]
  %v1969 = vld [vmem:[%s3 + $0x58] sm:$0xf]
  %v1970 = vld [vmem:[%s3 + $0x5c] sm:$0xf]
  %v1971 = vld [vmem:[%s3 + $0x60] sm:$0xf]
  %v1972 = vld [vmem:[%s3 + $0x64] sm:$0xf]
  %v1973 = vld [vmem:[%s3 + $0x68] sm:$0xf]
  %v1974 = vld [vmem:[%s3 + $0x6c] sm:$0xf]
  %v1975 = vld [vmem:[%s3 + $0x70] sm:$0xf]
  %v1976 = vld [vmem:[%s3 + $0x74] sm:$0xf]
  %v1977 = vld [vmem:[%s3 + $0x78] sm:$0xf]
  %v1978 = vld [vmem:[%s3 + $0x7c] sm:$0xf]
  %v1979 = vld [vmem:[%s3 + $0x80] sm:$0xf]
  %v1980 = vld [vmem:[%s3 + $0x84] sm:$0xf]
  %v1981 = vld [vmem:[%s3 + $0x88] sm:$0xf]
  %v1982 = vld [vmem:[%s3 + $0x8c] sm:$0xf]
  %v1983 = vld [vmem:[%s3 + $0x90] sm:$0xf]
  %v1984 = vld [vmem:[%s3 + $0x94] sm:$0xf]
  %v1985 = vld [vmem:[%s3 + $0x98] sm:$0xf]
  %v1986 = vld [vmem:[%s3 + $0x9c] sm:$0xf]
  %v1987 = vld [vmem:[%s3 + $0xa0] sm:$0xf]
  %v1988 = vld [vmem:[%s3 + $0xa4] sm:$0xf]
  %v1989 = vld [vmem:[%s3 + $0xa8] sm:$0xf]
  %v1990 = vld [vmem:[%s3 + $0xac] sm:$0xf]
  %v1991 = vld [vmem:[%s3 + $0xb0] sm:$0xf]
  %v1992 = vld [vmem:[%s3 + $0xb4] sm:$0xf]
  %v1993 = vld [vmem:[%s3 + $0xb8] sm:$0xf]
  %v1994 = vld [vmem:[%s3 + $0xbc] sm:$0xf]
  %v1995 = vld [vmem:[%s3 + $0xc0] sm:$0xf]
  %v1996 = vld [vmem:[%s3 + $0xc4] sm:$0xf]
  %v1997 = vld [vmem:[%s3 + $0xc8] sm:$0xf]
  %v1998 = vld [vmem:[%s3 + $0xcc] sm:$0xf]
  %v1999 = vld [vmem:[%s3 + $0xd0] sm:$0xf]
  %v2000 = vld [vmem:[%s3 + $0xd4] sm:$0xf]
  %v2001 = vld [vmem:[%s3 + $0xd8] sm:$0xf]
  %v2002 = vld [vmem:[%s3 + $0xdc] sm:$0xf]
  %v2003 = vld [vmem:[%s3 + $0xe0] sm:$0xf]
  %v2004 = vld [vmem:[%s3 + $0xe4] sm:$0xf]
  %v2005 = vld [vmem:[%s3 + $0xe8] sm:$0xf]
  %v2006 = vld [vmem:[%s3 + $0xec] sm:$0xf]
  %v2007 = vld [vmem:[%s3 + $0xf0] sm:$0xf]
  %v2008 = vld [vmem:[%s3 + $0xf4] sm:$0xf]
  %v2009 = vld [vmem:[%s3 + $0xf8] sm:$0xf]
  %v2010 = vld [vmem:[%s3 + $0xfc] sm:$0xf]
  %v2011 = vld [vmem:[%s4] sm:$0x1]
  %v2013 = vlaneseq
  %v2014 = vshrl.u32 %v2013, 7
  %v2015 = vsub.s32 0, %v2014
  %v2016 = vrot.slane %v2011, %v2015
  %v2082 = vunpack.c.l.b16 %v1947
  %v2083 = vunpack.c.l.b16 %v1948
  %v2084 = vunpack.c.l.b16 %v1949
  %v2085 = vunpack.c.l.b16 %v1950
  %v2086 = vunpack.c.l.b16 %v1951
  %v2087 = vunpack.c.l.b16 %v1952
  %v2088 = vunpack.c.l.b16 %v1953
  %v2089 = vunpack.c.l.b16 %v1954
  %v2090 = vunpack.c.l.b16 %v1955
  %v2091 = vunpack.c.l.b16 %v1956
  %v2092 = vunpack.c.l.b16 %v1957
  %v2093 = vunpack.c.l.b16 %v1958
  %v2094 = vunpack.c.l.b16 %v1959
  %v2095 = vunpack.c.l.b16 %v1960
  %v2096 = vunpack.c.l.b16 %v1961
  %v2097 = vunpack.c.l.b16 %v1962
  %v2098 = vunpack.c.l.b16 %v1963
  %v2099 = vunpack.c.l.b16 %v1964
  %v2100 = vunpack.c.l.b16 %v1965
  %v2101 = vunpack.c.l.b16 %v1966
  %v2102 = vunpack.c.l.b16 %v1967
  %v2103 = vunpack.c.l.b16 %v1968
  %v2104 = vunpack.c.l.b16 %v1969
  %v2105 = vunpack.c.l.b16 %v1970
  %v2106 = vunpack.c.l.b16 %v1971
  %v2107 = vunpack.c.l.b16 %v1972
  %v2108 = vunpack.c.l.b16 %v1973
  %v2109 = vunpack.c.l.b16 %v1974
  %v2110 = vunpack.c.l.b16 %v1975
  %v2111 = vunpack.c.l.b16 %v1976
  %v2112 = vunpack.c.l.b16 %v1977
  %v2113 = vunpack.c.l.b16 %v1978
  %v2114 = vunpack.c.l.b16 %v1979
  %v2115 = vunpack.c.l.b16 %v1980
  %v2116 = vunpack.c.l.b16 %v1981
  %v2117 = vunpack.c.l.b16 %v1982
  %v2118 = vunpack.c.l.b16 %v1983
  %v2119 = vunpack.c.l.b16 %v1984
  %v2120 = vunpack.c.l.b16 %v1985
  %v2121 = vunpack.c.l.b16 %v1986
  %v2122 = vunpack.c.l.b16 %v1987
  %v2123 = vunpack.c.l.b16 %v1988
  %v2124 = vunpack.c.l.b16 %v1989
  %v2125 = vunpack.c.l.b16 %v1990
  %v2126 = vunpack.c.l.b16 %v1991
  %v2127 = vunpack.c.l.b16 %v1992
  %v2128 = vunpack.c.l.b16 %v1993
  %v2129 = vunpack.c.l.b16 %v1994
  %v2130 = vunpack.c.l.b16 %v1995
  %v2131 = vunpack.c.l.b16 %v1996
  %v2132 = vunpack.c.l.b16 %v1997
  %v2133 = vunpack.c.l.b16 %v1998
  %v2134 = vunpack.c.l.b16 %v1999
  %v2135 = vunpack.c.l.b16 %v2000
  %v2136 = vunpack.c.l.b16 %v2001
  %v2137 = vunpack.c.l.b16 %v2002
  %v2138 = vunpack.c.l.b16 %v2003
  %v2139 = vunpack.c.l.b16 %v2004
  %v2140 = vunpack.c.l.b16 %v2005
  %v2141 = vunpack.c.l.b16 %v2006
  %v2142 = vunpack.c.l.b16 %v2007
  %v2143 = vunpack.c.l.b16 %v2008
  %v2144 = vunpack.c.l.b16 %v2009
  %v2145 = vunpack.c.l.b16 %v2010
  %v2146 = vpack.c.b16 %v2083, %v2082
  %v2147 = vpack.c.b16 %v2085, %v2084
  %v2148 = vpack.c.b16 %v2087, %v2086
  %v2149 = vpack.c.b16 %v2089, %v2088
  %v2150 = vpack.c.b16 %v2091, %v2090
  %v2151 = vpack.c.b16 %v2093, %v2092
  %v2152 = vpack.c.b16 %v2095, %v2094
  %v2153 = vpack.c.b16 %v2097, %v2096
  %v2154 = vpack.c.b16 %v2099, %v2098
  %v2155 = vpack.c.b16 %v2101, %v2100
  %v2156 = vpack.c.b16 %v2103, %v2102
  %v2157 = vpack.c.b16 %v2105, %v2104
  %v2158 = vpack.c.b16 %v2107, %v2106
  %v2159 = vpack.c.b16 %v2109, %v2108
  %v2160 = vpack.c.b16 %v2111, %v2110
  %v2161 = vpack.c.b16 %v2113, %v2112
  %v2162 = vpack.c.b16 %v2115, %v2114
  %v2163 = vpack.c.b16 %v2117, %v2116
  %v2164 = vpack.c.b16 %v2119, %v2118
  %v2165 = vpack.c.b16 %v2121, %v2120
  %v2166 = vpack.c.b16 %v2123, %v2122
  %v2167 = vpack.c.b16 %v2125, %v2124
  %v2168 = vpack.c.b16 %v2127, %v2126
  %v2169 = vpack.c.b16 %v2129, %v2128
  %v2170 = vpack.c.b16 %v2131, %v2130
  %v2171 = vpack.c.b16 %v2133, %v2132
  %v2172 = vpack.c.b16 %v2135, %v2134
  %v2173 = vpack.c.b16 %v2137, %v2136
  %v2174 = vpack.c.b16 %v2139, %v2138
  %v2175 = vpack.c.b16 %v2141, %v2140
  %v2176 = vpack.c.b16 %v2143, %v2142
  %v2177 = vpack.c.b16 %v2145, %v2144
  %2210 = vmatprep.subr.bf16.mxu0 0
  %2211 = vmatpush1.bf16.msra.mxu0 %v2146
  %2212 = vmatprep.subr.bf16.mxu0 0
  %2213 = vmatpush1.bf16.msra.mxu0 %v2147
  %2214 = vmatprep.subr.bf16.mxu0 0
  %2215 = vmatpush1.bf16.msra.mxu0 %v2148
  %2216 = vmatprep.subr.bf16.mxu0 0
  %2217 = vmatpush1.bf16.msra.mxu0 %v2149
  %2218 = vmatprep.subr.bf16.mxu0 0
  %2219 = vmatpush1.bf16.msra.mxu0 %v2150
  %2220 = vmatprep.subr.bf16.mxu0 0
  %2221 = vmatpush1.bf16.msra.mxu0 %v2151
  %2222 = vmatprep.subr.bf16.mxu0 0
  %2223 = vmatpush1.bf16.msra.mxu0 %v2152
  %2224 = vmatprep.subr.bf16.mxu0 0
  %2225 = vmatpush1.bf16.msra.mxu0 %v2153
  %2226 = vmatprep.subr.bf16.mxu0 0
  %2227 = vmatpush1.bf16.msra.mxu0 %v2154
  %2228 = vmatprep.subr.bf16.mxu0 0
  %2229 = vmatpush1.bf16.msra.mxu0 %v2155
  %2230 = vmatprep.subr.bf16.mxu0 0
  %2231 = vmatpush1.bf16.msra.mxu0 %v2156
  %2232 = vmatprep.subr.bf16.mxu0 0
  %2233 = vmatpush1.bf16.msra.mxu0 %v2157
  %2234 = vmatprep.subr.bf16.mxu0 0
  %2235 = vmatpush1.bf16.msra.mxu0 %v2158
  %2236 = vmatprep.subr.bf16.mxu0 0
  %2237 = vmatpush1.bf16.msra.mxu0 %v2159
  %2238 = vmatprep.subr.bf16.mxu0 0
  %2239 = vmatpush1.bf16.msra.mxu0 %v2160
  %2240 = vmatprep.subr.bf16.mxu0 0
  %2241 = vmatpush1.bf16.msra.mxu0 %v2161
  %2242 = vmatprep.mubr.bf16.mxu0 %v1944
  %2243 = vmatmul.mubr.bf16.gmra.mrb[0].mxu0 %v1943
  %v2244 = vpop.f32.mrb[0].mxu0
  %v2245 = vadd.f32 %v2016, %v2244
  %v2246 = vpop.f32.mrb[0].mxu0
  %v2247 = vpop.f32.mrb[0].mxu0
  %v2248 = vpop.f32.mrb[0].mxu0
  %2249 = vdwg.mxu0
  %2250 = vmatprep.subr.bf16.mxu0 0
  %2251 = vmatpush1.bf16.msra.mxu0 %v2162
  %2252 = vmatprep.subr.bf16.mxu0 0
  %2253 = vmatpush1.bf16.msra.mxu0 %v2163
  %2254 = vmatprep.subr.bf16.mxu0 0
  %2255 = vmatpush1.bf16.msra.mxu0 %v2164
  %2256 = vmatprep.subr.bf16.mxu0 0
  %2257 = vmatpush1.bf16.msra.mxu0 %v2165
  %2258 = vmatprep.subr.bf16.mxu0 0
  %2259 = vmatpush1.bf16.msra.mxu0 %v2166
  %2260 = vmatprep.subr.bf16.mxu0 0
  %2261 = vmatpush1.bf16.msra.mxu0 %v2167
  %2262 = vmatprep.subr.bf16.mxu0 0
  %2263 = vmatpush1.bf16.msra.mxu0 %v2168
  %2264 = vmatprep.subr.bf16.mxu0 0
  %2265 = vmatpush1.bf16.msra.mxu0 %v2169
  %2266 = vmatprep.subr.bf16.mxu0 0
  %2267 = vmatpush1.bf16.msra.mxu0 %v2170
  %2268 = vmatprep.subr.bf16.mxu0 0
  %2269 = vmatpush1.bf16.msra.mxu0 %v2171
  %2270 = vmatprep.subr.bf16.mxu0 0
  %2271 = vmatpush1.bf16.msra.mxu0 %v2172
  %2272 = vmatprep.subr.bf16.mxu0 0
  %2273 = vmatpush1.bf16.msra.mxu0 %v2173
  %2274 = vmatprep.subr.bf16.mxu0 0
  %2275 = vmatpush1.bf16.msra.mxu0 %v2174
  %2276 = vmatprep.subr.bf16.mxu0 0
  %2277 = vmatpush1.bf16.msra.mxu0 %v2175
  %2278 = vmatprep.subr.bf16.mxu0 0
  %2279 = vmatpush1.bf16.msra.mxu0 %v2176
  %2280 = vmatprep.subr.bf16.mxu0 0
  %2281 = vmatpush1.bf16.msra.mxu0 %v2177
  %2282 = vmatprep.mubr.bf16.mxu0 %v1946
  %2283 = vmatmul.mubr.bf16.gmra.mrb[0].mxu0 %v1945
  %v2284 = vpop.f32.mrb[0].mxu0
  %v2285 = vadd.f32 %v2245, %v2284
  %v2286 = vpop.f32.mrb[0].mxu0
  %v2287 = vpop.f32.mrb[0].mxu0
  %v2288 = vpop.f32.mrb[0].mxu0
  %2289 = vdwg.mxu0
  %2290 = vst [vmem:[%s5] sm:$0xff] %v2285
  // Predicated region
  $region22: #{baseline_train_forward.1} parent=0 // pred_check
    _
  $region23: #{baseline_train_forward.1} parent=0 // pred_check_branch
    %2292 = sbr.rel (0) target = $region25
  $region24: #{baseline_train_forward.1} parent=0 // pred_region
    _
  $region25: #{baseline_train_forward.1} parent=0 // pred_fallthru
    _
  // Predicated region
  $region26: #{baseline_train_forward.1} parent=0 // pred_check
    _
  $region27: #{baseline_train_forward.1} parent=0 // pred_check_branch
    %2294 = sbr.rel (0) target = $region29
  $region28: #{baseline_train_forward.1} parent=0 // pred_region
    _
  $region29: #{baseline_train_forward.1} parent=0 // pred_fallthru
    _

</llo_original>
